<compile_context>
chip_gen: v7x
topology: tpu7x:2x2x1
jax: 0.10.0
libtpu: 0.0.40
codegen_flags: <defaults>
</compile_context>

<pallas_src>
import functools

import jax
import jax.numpy as jnp
from jax.experimental import pallas as pl
from jax.experimental.pallas import tpu as pltpu

LANE = 128
SUBLANE = 8


def _round_up(n, m):
    return (n + m - 1) // m * m


# --------------------------------------------------------------------------
# Kernel 1: serial recurrence.  Only h_t = xw1h_t + h_{t-1} @ Whh lives here.
# --------------------------------------------------------------------------
def rnn_recurrence_kernel(xw1h_ref, h0_ref, whh_ref, hseq_ref, h_scr, *, tile_t):
    @pl.when(pl.program_id(0) == 0)
    def _():
        h_scr[...] = h0_ref[...]

    whh = whh_ref[...]  # resident weight, hoisted out of the step loop

    def step(i, h):
        h_new = (xw1h_ref[i].astype(jnp.float32)
                 + jnp.dot(h.astype(whh.dtype), whh,
                           preferred_element_type=jnp.float32))
        hseq_ref[i] = h_new.astype(hseq_ref.dtype)
        return h_new  # f32 carry stays in vregs

    h_last = jax.lax.fori_loop(0, tile_t, step, h_scr[...],
                               unroll=min(tile_t, 8))
    h_scr[...] = h_last  # hand the carry to the next T tile


# --------------------------------------------------------------------------
# Kernel 2: parallel-over-T output head.
#   o1 = xw1o + h_prev @ Who ;  o2 = h_new @ W2h + o1 @ W2o + b2 ; log_softmax
# Padded output lanes carry -1e30 baked into b2, so no in-kernel masking.
# --------------------------------------------------------------------------
def rnn_output_kernel(hnew_ref, hprev_ref, xo_ref, who_ref, w2h_ref, w2o_ref,
                      b2_ref, out_ref):
    wd = w2o_ref.dtype
    o1 = (xo_ref[...].astype(jnp.float32)
          + jnp.dot(hprev_ref[...], who_ref[...],
                    preferred_element_type=jnp.float32))
    o2 = (jnp.dot(hnew_ref[...], w2h_ref[...],
                  preferred_element_type=jnp.float32)
          + jnp.dot(o1.astype(wd), w2o_ref[...],
                    preferred_element_type=jnp.float32)
          + b2_ref[...])
    # dropout(p=0.1) is identity in eval mode.
    m = jnp.max(o2, axis=-1, keepdims=True)
    sh = o2 - m
    lse = jnp.log(jnp.sum(jnp.exp(sh), axis=-1, keepdims=True))
    out_ref[...] = (sh - lse).astype(out_ref.dtype)


# --------------------------------------------------------------------------
# Host-side orchestration
# --------------------------------------------------------------------------
def rnn_sequence(cat_seq, in_seq, hidden0, weights, *, hidden_size, output_size):
    """Applies the PyTorch RNN.forward step T times.

    cat_seq: (T, B, n_states), in_seq: (T, B, input_size), hidden0: (B, H).
    Returns (log_probs (T, B, O), final_hidden (B, H)).
    """
    T, B, _ = cat_seq.shape
    H, O = hidden_size, output_size

    wxh, wxo, bh, bo = weights["wxh"], weights["wxo"], weights["bh"], weights["bo"]
    whh, who = weights["whh"], weights["who"]
    w2h, w2o, b2m = weights["w2h"], weights["w2o"], weights["b2m"]

    cdtype = whh.dtype
    Hp = whh.shape[0]
    Op = w2o.shape[0]
    Bp = _round_up(max(B, SUBLANE), SUBLANE)
    tile_t = T if T <= 32 else 32
    Tp = _round_up(T, tile_t)

    # ---- bulk, T-batched precompute of the non-recurrent projections (XLA) ----
    x = jnp.concatenate([cat_seq, in_seq], axis=-1).astype(cdtype)  # (T,B,CI), unpadded CI
    xw1h = (jnp.einsum("tbc,ch->tbh", x, wxh,
                       preferred_element_type=jnp.float32) + bh).astype(cdtype)
    xw1o = (jnp.einsum("tbc,co->tbo", x, wxo,
                       preferred_element_type=jnp.float32) + bo).astype(cdtype)
    xw1h = jnp.pad(xw1h, ((0, Tp - T), (0, Bp - B), (0, 0)))
    xw1o = jnp.pad(xw1o, ((0, Tp - T), (0, Bp - B), (0, 0)))
    h0 = jnp.pad(hidden0.astype(jnp.float32), ((0, Bp - B), (0, Hp - H)))

    # ---- serial recurrence (grid over T tiles, "arbitrary") ----
    rec_kernel = functools.partial(rnn_recurrence_kernel, tile_t=tile_t)
    hseq = pl.pallas_call(
        rec_kernel,
        out_shape=jax.ShapeDtypeStruct((Tp, Bp, Hp), cdtype),
        grid_spec=pltpu.PrefetchScalarGridSpec(
            num_scalar_prefetch=0,
            grid=(Tp // tile_t,),
            in_specs=[
                pl.BlockSpec((tile_t, Bp, Hp), lambda t: (t, 0, 0)),  # xw1h tile
                pl.BlockSpec((Bp, Hp), lambda t: (0, 0)),             # h0 (resident)
                pl.BlockSpec((Hp, Hp), lambda t: (0, 0)),             # Whh (resident)
            ],
            out_specs=pl.BlockSpec((tile_t, Bp, Hp), lambda t: (t, 0, 0)),
            scratch_shapes=[pltpu.VMEM((Bp, Hp), jnp.float32)],        # carry across tiles
        ),
        compiler_params=pltpu.CompilerParams(
            dimension_semantics=("arbitrary",)),
    )(xw1h, h0, whh)

    # hidden that *entered* each step: (h0, h1, ..., h_{Tp-1})
    hprev = jnp.concatenate([h0[None].astype(cdtype), hseq[:-1]], axis=0)

    rows = Tp * Bp
    rb = tile_t * Bp
    hnew2 = hseq.reshape(rows, Hp)
    hprev2 = hprev.reshape(rows, Hp)
    xo2 = xw1o.reshape(rows, Op)

    # ---- parallel output head (o2o + log-softmax), big row tiles ----
    out2 = pl.pallas_call(
        rnn_output_kernel,
        out_shape=jax.ShapeDtypeStruct((rows, Op), jnp.float32),
        grid_spec=pltpu.PrefetchScalarGridSpec(
            num_scalar_prefetch=0,
            grid=(rows // rb,),
            in_specs=[
                pl.BlockSpec((rb, Hp), lambda r: (r, 0)),   # h_new rows
                pl.BlockSpec((rb, Hp), lambda r: (r, 0)),   # h_prev rows
                pl.BlockSpec((rb, Op), lambda r: (r, 0)),   # xw1o rows
                pl.BlockSpec((Hp, Op), lambda r: (0, 0)),   # Who (resident)
                pl.BlockSpec((Hp, Op), lambda r: (0, 0)),   # W2h (resident)
                pl.BlockSpec((Op, Op), lambda r: (0, 0)),   # W2o (resident)
                pl.BlockSpec((1, Op), lambda r: (0, 0)),    # b2 (+ baked lane mask)
            ],
            out_specs=pl.BlockSpec((rb, Op), lambda r: (r, 0)),
        ),
        compiler_params=pltpu.CompilerParams(
            dimension_semantics=("parallel",)),
    )(hnew2, hprev2, xo2, who, w2h, w2o, b2m)

    out = out2.reshape(Tp, Bp, Op)[:T, :B, :O]
    h_fin = hseq[T - 1, :B, :H].astype(jnp.float32)
    return out, h_fin


def rnn_forward(category, inp, hidden, weights, *, hidden_size, output_size):
    """Single-step equivalent of RNN.forward on (B, 1, F) tensors."""
    cat_seq = jnp.transpose(category, (1, 0, 2))
    in_seq = jnp.transpose(inp, (1, 0, 2))
    out_seq, h_fin = rnn_sequence(cat_seq, in_seq, hidden[:, 0, :], weights,
                                  hidden_size=hidden_size,
                                  output_size=output_size)
    return jnp.transpose(out_seq, (1, 0, 2)), h_fin[:, None, :]


def init_params(key, n_states, input_size, hidden_size, output_size):
    """Parameters in the PyTorch nn.Linear layout (weight (out,in), bias (out,))."""
    C = n_states + input_size + hidden_size
    ks = jax.random.split(key, 6)
    s = 0.1
    return dict(
        i2h_w=s * jax.random.normal(ks[0], (hidden_size, C), jnp.float32),
        i2h_b=s * jax.random.normal(ks[1], (hidden_size,), jnp.float32),
        i2o_w=s * jax.random.normal(ks[2], (output_size, C), jnp.float32),
        i2o_b=s * jax.random.normal(ks[3], (output_size,), jnp.float32),
        o2o_w=s * jax.random.normal(ks[4], (output_size, hidden_size + output_size),
                                    jnp.float32),
        o2o_b=s * jax.random.normal(ks[5], (output_size,), jnp.float32),
    )


def pack_params(params, n_states, input_size, hidden_size, output_size,
                compute_dtype=jnp.bfloat16):
    """PyTorch-layout params -> split, lane-padded, (optionally bf16) kernel weights."""
    H, O = hidden_size, output_size
    CI = n_states + input_size
    Hp = _round_up(H, LANE)
    Op = _round_up(O, LANE)

    i2h_wt = params["i2h_w"].T          # (CI+H, H); rows: [category|input|hidden]
    i2o_wt = params["i2o_w"].T          # (CI+H, O)
    o2o_wt = params["o2o_w"].T          # (H+O, O); rows: [hidden|output]

    wxh = jnp.zeros((CI, Hp), jnp.float32).at[:, :H].set(i2h_wt[:CI])
    whh = jnp.zeros((Hp, Hp), jnp.float32).at[:H, :H].set(i2h_wt[CI:])
    wxo = jnp.zeros((CI, Op), jnp.float32).at[:, :O].set(i2o_wt[:CI])
    who = jnp.zeros((Hp, Op), jnp.float32).at[:H, :O].set(i2o_wt[CI:])
    w2h = jnp.zeros((Hp, Op), jnp.float32).at[:H, :O].set(o2o_wt[:H])
    w2o = jnp.zeros((Op, Op), jnp.float32).at[:O, :O].set(o2o_wt[H:])

    bh = jnp.zeros((Hp,), jnp.float32).at[:H].set(params["i2h_b"])
    bo = jnp.zeros((Op,), jnp.float32).at[:O].set(params["i2o_b"])
    # Bake the padded-lane mask into b2: lanes [O:Op] = -1e30, so the in-kernel
    # log-softmax needs no iota/compare/select (padded s1 cols hit zero W2 rows).
    b2m = jnp.full((1, Op), -1e30, jnp.float32).at[0, :O].set(params["o2o_b"])

    cd = compute_dtype
    return dict(wxh=wxh.astype(cd), wxo=wxo.astype(cd), bh=bh, bo=bo,
                whh=whh.astype(cd), who=who.astype(cd),
                w2h=w2h.astype(cd), w2o=w2o.astype(cd), b2m=b2m)


if __name__ == "__main__":
    B, T = 2, 8
    n_states, input_size, hidden_size, output_size = 8, 16, 32, 16

    key = jax.random.PRNGKey(0)
    k_cat, k_in, k_par = jax.random.split(key, 3)

    cat_seq = jax.random.normal(k_cat, (T, B, n_states), jnp.float32)
    in_seq = jax.random.normal(k_in, (T, B, input_size), jnp.float32)
    h0 = jnp.zeros((B, hidden_size), jnp.float32)          # initHidden

    params = init_params(k_par, n_states, input_size, hidden_size, output_size)

    # Reference: plain-JAX per-step loop using the original PyTorch-layout params.
    def ref_step(h, cat_t, in_t):
        comb = jnp.concatenate([cat_t, in_t, h], axis=-1)
        hid = comb @ params["i2h_w"].T + params["i2h_b"]
        o1 = comb @ params["i2o_w"].T + params["i2o_b"]
        oc = jnp.concatenate([hid, o1], axis=-1)
        o2 = oc @ params["o2o_w"].T + params["o2o_b"]
        return hid, jax.nn.log_softmax(o2, axis=-1)

    h_ref = h0
    outs_ref = []
    for t in range(T):
        h_ref, o_ref = ref_step(h_ref, cat_seq[t], in_seq[t])
        outs_ref.append(o_ref)
    outs_ref = jnp.stack(outs_ref)

    seq_fn = jax.jit(rnn_sequence, static_argnames=("hidden_size", "output_size"))

    # f32 mode: tight check.  bf16 mode: MXU-throughput config, looser tolerance.
    for cdtype, atol in ((jnp.float32, 2e-3), (jnp.bfloat16, 5e-2)):
        weights = pack_params(params, n_states, input_size, hidden_size,
                              output_size, compute_dtype=cdtype)
        out_seq, h_fin = seq_fn(cat_seq, in_seq, h0, weights,
                                hidden_size=hidden_size, output_size=output_size)
        jax.block_until_ready((out_seq, h_fin))
        assert jnp.allclose(out_seq, outs_ref, atol=atol, rtol=atol), \
            f"output mismatch ({cdtype})"
        assert jnp.allclose(h_fin, h_ref, atol=atol, rtol=atol), \
            f"hidden mismatch ({cdtype})"

    # Single-step (B,1,F) module-compatible wrapper (f32 weights).
    weights_f32 = pack_params(params, n_states, input_size, hidden_size,
                              output_size, compute_dtype=jnp.float32)
    out1, hid1 = rnn_forward(cat_seq[0][:, None, :], in_seq[0][:, None, :],
                             h0[:, None, :], weights_f32,
                             hidden_size=hidden_size, output_size=output_size)
    jax.block_until_ready((out1, hid1))
    assert jnp.allclose(out1[:, 0, :], outs_ref[0], atol=2e-3, rtol=2e-3)
    assert jnp.allclose(hid1[:, 0, :], ref_step(h0, cat_seq[0], in_seq[0])[0],
                        atol=2e-3, rtol=2e-3)

    print("KERNEL_OK")
</pallas_src>

<mosaic_0001>
module attributes {stable_mosaic.version = 11 : i64} {
  func.func @rnn_recurrence_kernel(%arg0: i32, %arg1: memref<8x8x128xf32, #tpu.memory_space<vmem>>, %arg2: memref<8x128xf32, #tpu.memory_space<vmem>>, %arg3: memref<128x128xf32, #tpu.memory_space<vmem>>, %arg4: memref<8x8x128xf32, #tpu.memory_space<vmem>>, %arg5: memref<8x128xf32, #tpu.memory_space<vmem>>) attributes {dimension_semantics = [#tpu.dimension_semantics<arbitrary>], iteration_bounds = array<i64: 1>, scalar_prefetch = 0 : i64, scratch_operands = 1 : i64, tpu.core_type = #tpu.core_type<tc>, window_params = [{transform_indices = @transform_0, window_bounds = array<i64: 8, 8, 128>}, {pipeline_mode = #tpu.pipeline_mode<synchronous>, transform_indices = @transform_1, window_bounds = array<i64: 8, 128>}, {pipeline_mode = #tpu.pipeline_mode<synchronous>, transform_indices = @transform_2, window_bounds = array<i64: 128, 128>}, {transform_indices = @transform_3, window_bounds = array<i64: 8, 8, 128>}]} {
    %c0_i32 = arith.constant 0 : i32
    %0 = arith.cmpi eq, %arg0, %c0_i32 : i32
    %1 = arith.extui %0 : i1 to i32
    %c0_i32_0 = arith.constant 0 : i32
    %2 = arith.cmpi ne, %1, %c0_i32_0 : i32
    scf.if %2 {
      %c0_46 = arith.constant 0 : index
      %c0_47 = arith.constant 0 : index
      %78 = vector.load %arg2[%c0_46, %c0_47] : memref<8x128xf32, #tpu.memory_space<vmem>>, vector<8x128xf32>
      %c0_48 = arith.constant 0 : index
      %c0_49 = arith.constant 0 : index
      %79 = vector.load %arg5[%c0_48, %c0_49] : memref<8x128xf32, #tpu.memory_space<vmem>>, vector<8x128xf32>
      tpu.vector_store %arg5[%c0_48, %c0_49], %78 {strides = array<i32>} : memref<8x128xf32, #tpu.memory_space<vmem>>, vector<8x128xf32>,
    } else {
    }
    %c0 = arith.constant 0 : index
    %c0_1 = arith.constant 0 : index
    %3 = vector.load %arg3[%c0, %c0_1] : memref<128x128xf32, #tpu.memory_space<vmem>>, vector<128x128xf32>
    %c0_2 = arith.constant 0 : index
    %c0_3 = arith.constant 0 : index
    %4 = vector.load %arg5[%c0_2, %c0_3] : memref<8x128xf32, #tpu.memory_space<vmem>>, vector<8x128xf32>
    %c0_i32_4 = arith.constant 0 : i32
    %5 = arith.index_cast %c0_i32_4 : i32 to index
    %c0_5 = arith.constant 0 : index
    %c0_6 = arith.constant 0 : index
    %6 = vector.load %arg1[%5, %c0_5, %c0_6] : memref<8x8x128xf32, #tpu.memory_space<vmem>>, vector<1x8x128xf32>
    %7 = vector.shape_cast %6 : vector<1x8x128xf32> to vector<8x128xf32>
    %cst = arith.constant dense<0.000000e+00> : vector<8x128xf32>
    %8 = tpu.matmul %4, %3, %cst {dimension_numbers = #tpu.dot_dimension_numbers<[1], [0], [0], [1], [0, 0, 1, 1], [], []>} : vector<8x128xf32>, vector<128x128xf32>, vector<8x128xf32> -> vector<8x128xf32>
    %9 = arith.addf %7, %8 : vector<8x128xf32>
    %10 = arith.index_cast %c0_i32_4 : i32 to index
    %c0_7 = arith.constant 0 : index
    %c0_8 = arith.constant 0 : index
    %11 = vector.load %arg4[%10, %c0_7, %c0_8] : memref<8x8x128xf32, #tpu.memory_space<vmem>>, vector<1x8x128xf32>
    %12 = vector.shape_cast %11 : vector<1x8x128xf32> to vector<8x128xf32>
    %13 = vector.shape_cast %9 : vector<8x128xf32> to vector<1x8x128xf32>
    tpu.vector_store %arg4[%10, %c0_7, %c0_8], %13 {strides = array<i32>} : memref<8x8x128xf32, #tpu.memory_space<vmem>>, vector<1x8x128xf32>,
    %c1_i32 = arith.constant 1 : i32
    %14 = arith.index_cast %c1_i32 : i32 to index
    %c0_9 = arith.constant 0 : index
    %c0_10 = arith.constant 0 : index
    %15 = vector.load %arg1[%14, %c0_9, %c0_10] : memref<8x8x128xf32, #tpu.memory_space<vmem>>, vector<1x8x128xf32>
    %16 = vector.shape_cast %15 : vector<1x8x128xf32> to vector<8x128xf32>
    %cst_11 = arith.constant dense<0.000000e+00> : vector<8x128xf32>
    %17 = tpu.matmul %9, %3, %cst_11 {dimension_numbers = #tpu.dot_dimension_numbers<[1], [0], [0], [1], [0, 0, 1, 1], [], []>} : vector<8x128xf32>, vector<128x128xf32>, vector<8x128xf32> -> vector<8x128xf32>
    %18 = arith.addf %16, %17 : vector<8x128xf32>
    %19 = arith.index_cast %c1_i32 : i32 to index
    %c0_12 = arith.constant 0 : index
    %c0_13 = arith.constant 0 : index
    %20 = vector.load %arg4[%19, %c0_12, %c0_13] : memref<8x8x128xf32, #tpu.memory_space<vmem>>, vector<1x8x128xf32>
    %21 = vector.shape_cast %20 : vector<1x8x128xf32> to vector<8x128xf32>
    %22 = vector.shape_cast %18 : vector<8x128xf32> to vector<1x8x128xf32>
    tpu.vector_store %arg4[%19, %c0_12, %c0_13], %22 {strides = array<i32>} : memref<8x8x128xf32, #tpu.memory_space<vmem>>, vector<1x8x128xf32>,
    %c2_i32 = arith.constant 2 : i32
    %23 = arith.index_cast %c2_i32 : i32 to index
    %c0_14 = arith.constant 0 : index
    %c0_15 = arith.constant 0 : index
    %24 = vector.load %arg1[%23, %c0_14, %c0_15] : memref<8x8x128xf32, #tpu.memory_space<vmem>>, vector<1x8x128xf32>
    %25 = vector.shape_cast %24 : vector<1x8x128xf32> to vector<8x128xf32>
    %cst_16 = arith.constant dense<0.000000e+00> : vector<8x128xf32>
    %26 = tpu.matmul %18, %3, %cst_16 {dimension_numbers = #tpu.dot_dimension_numbers<[1], [0], [0], [1], [0, 0, 1, 1], [], []>} : vector<8x128xf32>, vector<128x128xf32>, vector<8x128xf32> -> vector<8x128xf32>
    %27 = arith.addf %25, %26 : vector<8x128xf32>
    %28 = arith.index_cast %c2_i32 : i32 to index
    %c0_17 = arith.constant 0 : index
    %c0_18 = arith.constant 0 : index
    %29 = vector.load %arg4[%28, %c0_17, %c0_18] : memref<8x8x128xf32, #tpu.memory_space<vmem>>, vector<1x8x128xf32>
    %30 = vector.shape_cast %29 : vector<1x8x128xf32> to vector<8x128xf32>
    %31 = vector.shape_cast %27 : vector<8x128xf32> to vector<1x8x128xf32>
    tpu.vector_store %arg4[%28, %c0_17, %c0_18], %31 {strides = array<i32>} : memref<8x8x128xf32, #tpu.memory_space<vmem>>, vector<1x8x128xf32>,
    %c3_i32 = arith.constant 3 : i32
    %32 = arith.index_cast %c3_i32 : i32 to index
    %c0_19 = arith.constant 0 : index
    %c0_20 = arith.constant 0 : index
    %33 = vector.load %arg1[%32, %c0_19, %c0_20] : memref<8x8x128xf32, #tpu.memory_space<vmem>>, vector<1x8x128xf32>
    %34 = vector.shape_cast %33 : vector<1x8x128xf32> to vector<8x128xf32>
    %cst_21 = arith.constant dense<0.000000e+00> : vector<8x128xf32>
    %35 = tpu.matmul %27, %3, %cst_21 {dimension_numbers = #tpu.dot_dimension_numbers<[1], [0], [0], [1], [0, 0, 1, 1], [], []>} : vector<8x128xf32>, vector<128x128xf32>, vector<8x128xf32> -> vector<8x128xf32>
    %36 = arith.addf %34, %35 : vector<8x128xf32>
    %37 = arith.index_cast %c3_i32 : i32 to index
    %c0_22 = arith.constant 0 : index
    %c0_23 = arith.constant 0 : index
    %38 = vector.load %arg4[%37, %c0_22, %c0_23] : memref<8x8x128xf32, #tpu.memory_space<vmem>>, vector<1x8x128xf32>
    %39 = vector.shape_cast %38 : vector<1x8x128xf32> to vector<8x128xf32>
    %40 = vector.shape_cast %36 : vector<8x128xf32> to vector<1x8x128xf32>
    tpu.vector_store %arg4[%37, %c0_22, %c0_23], %40 {strides = array<i32>} : memref<8x8x128xf32, #tpu.memory_space<vmem>>, vector<1x8x128xf32>,
    %c4_i32 = arith.constant 4 : i32
    %41 = arith.index_cast %c4_i32 : i32 to index
    %c0_24 = arith.constant 0 : index
    %c0_25 = arith.constant 0 : index
    %42 = vector.load %arg1[%41, %c0_24, %c0_25] : memref<8x8x128xf32, #tpu.memory_space<vmem>>, vector<1x8x128xf32>
    %43 = vector.shape_cast %42 : vector<1x8x128xf32> to vector<8x128xf32>
    %cst_26 = arith.constant dense<0.000000e+00> : vector<8x128xf32>
    %44 = tpu.matmul %36, %3, %cst_26 {dimension_numbers = #tpu.dot_dimension_numbers<[1], [0], [0], [1], [0, 0, 1, 1], [], []>} : vector<8x128xf32>, vector<128x128xf32>, vector<8x128xf32> -> vector<8x128xf32>
    %45 = arith.addf %43, %44 : vector<8x128xf32>
    %46 = arith.index_cast %c4_i32 : i32 to index
    %c0_27 = arith.constant 0 : index
    %c0_28 = arith.constant 0 : index
    %47 = vector.load %arg4[%46, %c0_27, %c0_28] : memref<8x8x128xf32, #tpu.memory_space<vmem>>, vector<1x8x128xf32>
    %48 = vector.shape_cast %47 : vector<1x8x128xf32> to vector<8x128xf32>
    %49 = vector.shape_cast %45 : vector<8x128xf32> to vector<1x8x128xf32>
    tpu.vector_store %arg4[%46, %c0_27, %c0_28], %49 {strides = array<i32>} : memref<8x8x128xf32, #tpu.memory_space<vmem>>, vector<1x8x128xf32>,
    %c5_i32 = arith.constant 5 : i32
    %50 = arith.index_cast %c5_i32 : i32 to index
    %c0_29 = arith.constant 0 : index
    %c0_30 = arith.constant 0 : index
    %51 = vector.load %arg1[%50, %c0_29, %c0_30] : memref<8x8x128xf32, #tpu.memory_space<vmem>>, vector<1x8x128xf32>
    %52 = vector.shape_cast %51 : vector<1x8x128xf32> to vector<8x128xf32>
    %cst_31 = arith.constant dense<0.000000e+00> : vector<8x128xf32>
    %53 = tpu.matmul %45, %3, %cst_31 {dimension_numbers = #tpu.dot_dimension_numbers<[1], [0], [0], [1], [0, 0, 1, 1], [], []>} : vector<8x128xf32>, vector<128x128xf32>, vector<8x128xf32> -> vector<8x128xf32>
    %54 = arith.addf %52, %53 : vector<8x128xf32>
    %55 = arith.index_cast %c5_i32 : i32 to index
    %c0_32 = arith.constant 0 : index
    %c0_33 = arith.constant 0 : index
    %56 = vector.load %arg4[%55, %c0_32, %c0_33] : memref<8x8x128xf32, #tpu.memory_space<vmem>>, vector<1x8x128xf32>
    %57 = vector.shape_cast %56 : vector<1x8x128xf32> to vector<8x128xf32>
    %58 = vector.shape_cast %54 : vector<8x128xf32> to vector<1x8x128xf32>
    tpu.vector_store %arg4[%55, %c0_32, %c0_33], %58 {strides = array<i32>} : memref<8x8x128xf32, #tpu.memory_space<vmem>>, vector<1x8x128xf32>,
    %c6_i32 = arith.constant 6 : i32
    %59 = arith.index_cast %c6_i32 : i32 to index
    %c0_34 = arith.constant 0 : index
    %c0_35 = arith.constant 0 : index
    %60 = vector.load %arg1[%59, %c0_34, %c0_35] : memref<8x8x128xf32, #tpu.memory_space<vmem>>, vector<1x8x128xf32>
    %61 = vector.shape_cast %60 : vector<1x8x128xf32> to vector<8x128xf32>
    %cst_36 = arith.constant dense<0.000000e+00> : vector<8x128xf32>
    %62 = tpu.matmul %54, %3, %cst_36 {dimension_numbers = #tpu.dot_dimension_numbers<[1], [0], [0], [1], [0, 0, 1, 1], [], []>} : vector<8x128xf32>, vector<128x128xf32>, vector<8x128xf32> -> vector<8x128xf32>
    %63 = arith.addf %61, %62 : vector<8x128xf32>
    %64 = arith.index_cast %c6_i32 : i32 to index
    %c0_37 = arith.constant 0 : index
    %c0_38 = arith.constant 0 : index
    %65 = vector.load %arg4[%64, %c0_37, %c0_38] : memref<8x8x128xf32, #tpu.memory_space<vmem>>, vector<1x8x128xf32>
    %66 = vector.shape_cast %65 : vector<1x8x128xf32> to vector<8x128xf32>
    %67 = vector.shape_cast %63 : vector<8x128xf32> to vector<1x8x128xf32>
    tpu.vector_store %arg4[%64, %c0_37, %c0_38], %67 {strides = array<i32>} : memref<8x8x128xf32, #tpu.memory_space<vmem>>, vector<1x8x128xf32>,
    %c7_i32 = arith.constant 7 : i32
    %68 = arith.index_cast %c7_i32 : i32 to index
    %c0_39 = arith.constant 0 : index
    %c0_40 = arith.constant 0 : index
    %69 = vector.load %arg1[%68, %c0_39, %c0_40] : memref<8x8x128xf32, #tpu.memory_space<vmem>>, vector<1x8x128xf32>
    %70 = vector.shape_cast %69 : vector<1x8x128xf32> to vector<8x128xf32>
    %cst_41 = arith.constant dense<0.000000e+00> : vector<8x128xf32>
    %71 = tpu.matmul %63, %3, %cst_41 {dimension_numbers = #tpu.dot_dimension_numbers<[1], [0], [0], [1], [0, 0, 1, 1], [], []>} : vector<8x128xf32>, vector<128x128xf32>, vector<8x128xf32> -> vector<8x128xf32>
    %72 = arith.addf %70, %71 : vector<8x128xf32>
    %73 = arith.index_cast %c7_i32 : i32 to index
    %c0_42 = arith.constant 0 : index
    %c0_43 = arith.constant 0 : index
    %74 = vector.load %arg4[%73, %c0_42, %c0_43] : memref<8x8x128xf32, #tpu.memory_space<vmem>>, vector<1x8x128xf32>
    %75 = vector.shape_cast %74 : vector<1x8x128xf32> to vector<8x128xf32>
    %76 = vector.shape_cast %72 : vector<8x128xf32> to vector<1x8x128xf32>
    tpu.vector_store %arg4[%73, %c0_42, %c0_43], %76 {strides = array<i32>} : memref<8x8x128xf32, #tpu.memory_space<vmem>>, vector<1x8x128xf32>,
    %c8_i32 = arith.constant 8 : i32
    %c0_44 = arith.constant 0 : index
    %c0_45 = arith.constant 0 : index
    %77 = vector.load %arg5[%c0_44, %c0_45] : memref<8x128xf32, #tpu.memory_space<vmem>>, vector<8x128xf32>
    tpu.vector_store %arg5[%c0_44, %c0_45], %72 {strides = array<i32>} : memref<8x128xf32, #tpu.memory_space<vmem>>, vector<8x128xf32>,
    return
  }
  func.func @transform_0(%arg0: i32) -> (i32, i32, i32) {
    %c0_i32 = arith.constant 0 : i32
    %c0_i32_0 = arith.constant 0 : i32
    %c0_i32_1 = arith.constant 0 : i32
    return %arg0, %c0_i32, %c0_i32_0 : i32, i32, i32
  }
  func.func @transform_1(%arg0: i32) -> (i32, i32) {
    %c0_i32 = arith.constant 0 : i32
    %c0_i32_0 = arith.constant 0 : i32
    %c0_i32_1 = arith.constant 0 : i32
    return %c0_i32, %c0_i32_0 : i32, i32
  }
  func.func @transform_2(%arg0: i32) -> (i32, i32) {
    %c0_i32 = arith.constant 0 : i32
    %c0_i32_0 = arith.constant 0 : i32
    %c0_i32_1 = arith.constant 0 : i32
    return %c0_i32, %c0_i32_0 : i32, i32
  }
  func.func @transform_3(%arg0: i32) -> (i32, i32, i32) {
    %c0_i32 = arith.constant 0 : i32
    %c0_i32_0 = arith.constant 0 : i32
    %c0_i32_1 = arith.constant 0 : i32
    return %arg0, %c0_i32, %c0_i32_0 : i32, i32, i32
  }
}

module attributes {stable_mosaic.version = 11 : i64} {
  func.func @rnn_output_kernel(%arg0: i32, %arg1: memref<64x128xf32, #tpu.memory_space<vmem>>, %arg2: memref<64x128xf32, #tpu.memory_space<vmem>>, %arg3: memref<64x128xf32, #tpu.memory_space<vmem>>, %arg4: memref<128x128xf32, #tpu.memory_space<vmem>>, %arg5: memref<128x128xf32, #tpu.memory_space<vmem>>, %arg6: memref<128x128xf32, #tpu.memory_space<vmem>>, %arg7: memref<1x128xf32, #tpu.memory_space<vmem>>, %arg8: memref<64x128xf32, #tpu.memory_space<vmem>>) attributes {dimension_semantics = [#tpu.dimension_semantics<parallel>], iteration_bounds = array<i64: 1>, scalar_prefetch = 0 : i64, scratch_operands = 0 : i64, tpu.core_type = #tpu.core_type<tc>, window_params = [{transform_indices = @transform_0, window_bounds = array<i64: 64, 128>}, {transform_indices = @transform_1, window_bounds = array<i64: 64, 128>}, {transform_indices = @transform_2, window_bounds = array<i64: 64, 128>}, {pipeline_mode = #tpu.pipeline_mode<synchronous>, transform_indices = @transform_3, window_bounds = array<i64: 128, 128>}, {pipeline_mode = #tpu.pipeline_mode<synchronous>, transform_indices = @transform_4, window_bounds = array<i64: 128, 128>}, {pipeline_mode = #tpu.pipeline_mode<synchronous>, transform_indices = @transform_5, window_bounds = array<i64: 128, 128>}, {pipeline_mode = #tpu.pipeline_mode<synchronous>, transform_indices = @transform_6, window_bounds = array<i64: 1, 128>}, {transform_indices = @transform_7, window_bounds = array<i64: 64, 128>}]} {
    %c0 = arith.constant 0 : index
    %c0_0 = arith.constant 0 : index
    %0 = vector.load %arg3[%c0, %c0_0] : memref<64x128xf32, #tpu.memory_space<vmem>>, vector<64x128xf32>
    %c0_1 = arith.constant 0 : index
    %c0_2 = arith.constant 0 : index
    %1 = vector.load %arg2[%c0_1, %c0_2] : memref<64x128xf32, #tpu.memory_space<vmem>>, vector<64x128xf32>
    %c0_3 = arith.constant 0 : index
    %c0_4 = arith.constant 0 : index
    %2 = vector.load %arg4[%c0_3, %c0_4] : memref<128x128xf32, #tpu.memory_space<vmem>>, vector<128x128xf32>
    %cst = arith.constant dense<0.000000e+00> : vector<64x128xf32>
    %3 = tpu.matmul %1, %2, %cst {dimension_numbers = #tpu.dot_dimension_numbers<[1], [0], [0], [1], [0, 0, 1, 1], [], []>} : vector<64x128xf32>, vector<128x128xf32>, vector<64x128xf32> -> vector<64x128xf32>
    %4 = arith.addf %0, %3 : vector<64x128xf32>
    %c0_5 = arith.constant 0 : index
    %c0_6 = arith.constant 0 : index
    %5 = vector.load %arg1[%c0_5, %c0_6] : memref<64x128xf32, #tpu.memory_space<vmem>>, vector<64x128xf32>
    %c0_7 = arith.constant 0 : index
    %c0_8 = arith.constant 0 : index
    %6 = vector.load %arg5[%c0_7, %c0_8] : memref<128x128xf32, #tpu.memory_space<vmem>>, vector<128x128xf32>
    %cst_9 = arith.constant dense<0.000000e+00> : vector<64x128xf32>
    %7 = tpu.matmul %5, %6, %cst_9 {dimension_numbers = #tpu.dot_dimension_numbers<[1], [0], [0], [1], [0, 0, 1, 1], [], []>} : vector<64x128xf32>, vector<128x128xf32>, vector<64x128xf32> -> vector<64x128xf32>
    %c0_10 = arith.constant 0 : index
    %c0_11 = arith.constant 0 : index
    %8 = vector.load %arg6[%c0_10, %c0_11] : memref<128x128xf32, #tpu.memory_space<vmem>>, vector<128x128xf32>
    %cst_12 = arith.constant dense<0.000000e+00> : vector<64x128xf32>
    %9 = tpu.matmul %4, %8, %cst_12 {dimension_numbers = #tpu.dot_dimension_numbers<[1], [0], [0], [1], [0, 0, 1, 1], [], []>} : vector<64x128xf32>, vector<128x128xf32>, vector<64x128xf32> -> vector<64x128xf32>
    %10 = arith.addf %7, %9 : vector<64x128xf32>
    %c0_13 = arith.constant 0 : index
    %c0_14 = arith.constant 0 : index
    %11 = vector.load %arg7[%c0_13, %c0_14] : memref<1x128xf32, #tpu.memory_space<vmem>>, vector<1x128xf32>
    %12 = vector.broadcast %11 : vector<1x128xf32> to vector<64x128xf32>
    %13 = arith.addf %10, %12 : vector<64x128xf32>
    %cst_15 = arith.constant dense<0xFF800000> : vector<64xf32>
    %14 = vector.multi_reduction <maximumf>, %13, %cst_15 [1] : vector<64x128xf32> to vector<64xf32>
    %15 = vector.shape_cast %14 : vector<64xf32> to vector<64x1xf32>
    %16 = vector.broadcast %15 : vector<64x1xf32> to vector<64x128xf32>
    %17 = arith.subf %13, %16 : vector<64x128xf32>
    %18 = math.exp %17 : vector<64x128xf32>
    %cst_16 = arith.constant dense<0.000000e+00> : vector<64xf32>
    %19 = vector.multi_reduction <add>, %18, %cst_16 [1] : vector<64x128xf32> to vector<64xf32>
    %20 = vector.shape_cast %19 : vector<64xf32> to vector<64x1xf32>
    %21 = math.log %20 : vector<64x1xf32>
    %22 = vector.broadcast %21 : vector<64x1xf32> to vector<64x128xf32>
    %23 = arith.subf %17, %22 : vector<64x128xf32>
    %c0_17 = arith.constant 0 : index
    %c0_18 = arith.constant 0 : index
    %24 = vector.load %arg8[%c0_17, %c0_18] : memref<64x128xf32, #tpu.memory_space<vmem>>, vector<64x128xf32>
    tpu.vector_store %arg8[%c0_17, %c0_18], %23 {strides = array<i32>} : memref<64x128xf32, #tpu.memory_space<vmem>>, vector<64x128xf32>,
    return
  }
  func.func @transform_0(%arg0: i32) -> (i32, i32) {
    %c0_i32 = arith.constant 0 : i32
    %c0_i32_0 = arith.constant 0 : i32
    return %arg0, %c0_i32 : i32, i32
  }
  func.func @transform_1(%arg0: i32) -> (i32, i32) {
    %c0_i32 = arith.constant 0 : i32
    %c0_i32_0 = arith.constant 0 : i32
    return %arg0, %c0_i32 : i32, i32
  }
  func.func @transform_2(%arg0: i32) -> (i32, i32) {
    %c0_i32 = arith.constant 0 : i32
    %c0_i32_0 = arith.constant 0 : i32
    return %arg0, %c0_i32 : i32, i32
  }
  func.func @transform_3(%arg0: i32) -> (i32, i32) {
    %c0_i32 = arith.constant 0 : i32
    %c0_i32_0 = arith.constant 0 : i32
    %c0_i32_1 = arith.constant 0 : i32
    return %c0_i32, %c0_i32_0 : i32, i32
  }
  func.func @transform_4(%arg0: i32) -> (i32, i32) {
    %c0_i32 = arith.constant 0 : i32
    %c0_i32_0 = arith.constant 0 : i32
    %c0_i32_1 = arith.constant 0 : i32
    return %c0_i32, %c0_i32_0 : i32, i32
  }
  func.func @transform_5(%arg0: i32) -> (i32, i32) {
    %c0_i32 = arith.constant 0 : i32
    %c0_i32_0 = arith.constant 0 : i32
    %c0_i32_1 = arith.constant 0 : i32
    return %c0_i32, %c0_i32_0 : i32, i32
  }
  func.func @transform_6(%arg0: i32) -> (i32, i32) {
    %c0_i32 = arith.constant 0 : i32
    %c0_i32_0 = arith.constant 0 : i32
    %c0_i32_1 = arith.constant 0 : i32
    return %c0_i32, %c0_i32_0 : i32, i32
  }
  func.func @transform_7(%arg0: i32) -> (i32, i32) {
    %c0_i32 = arith.constant 0 : i32
    %c0_i32_0 = arith.constant 0 : i32
    return %arg0, %c0_i32 : i32, i32
  }
}

</mosaic_0001>

<llo_original>
// kernel: rnn_sequence.2
$region0: #{rnn_sequence.2}
  #allocation0 [shape = 'u32[]', space=smem, size = 0x4, offset = 0x4, fixed_abs, tag = 'smem constant byte address 0x4 - core index']
  #allocation1 [shape = 'u32[144,128]{1,0:T(1,128)}', space=vmem, size = 0x12000, scoped, tag = 'internal scratch']
  #allocation2 [shape = 'f32[8,128]{1,0:T(8,128)}', space=vmem, size = 0x1000, scoped, tag = 'scratch operand']
  %s0 = inlined_call_operand.vmem [shape: f32[8,8,128], index: 0, kind: input, shape index: {}]
  %s1 = inlined_call_operand.vmem [shape: f32[8,128], index: 1, kind: input, shape index: {}]
  %s2 = inlined_call_operand.vmem [shape: f32[128,128], index: 2, kind: input, shape index: {}]
  %s3 = inlined_call_operand.vmem [shape: f32[8,8,128], index: 3, kind: output, shape index: {}]
  %s4 = sld [smem:[#allocation0]]
  $region26: #{rnn_sequence.2} parent=0
    _
  %s6 = ssub.s32 1, %s4
  %s7 = scalar_select 0, %s6, %s4
  // Predicated region
  $region2: #{rnn_sequence.2} parent=0 // pred_check
    _
  $region3: #{rnn_sequence.2} parent=0 // pred_check_branch
    %9 = sbr.rel (0) target = $region5
  $region4: #{rnn_sequence.2} parent=0 // pred_region
    _
  $region5: #{rnn_sequence.2} parent=0 // pred_fallthru
    _
  // Predicated region
  $region6: #{rnn_sequence.2} parent=0 // pred_check
    _
  $region7: #{rnn_sequence.2} parent=0 // pred_check_branch
    %11 = sbr.rel (0) target = $region9
  $region8: #{rnn_sequence.2} parent=0 // pred_region
    _
  $region9: #{rnn_sequence.2} parent=0 // pred_fallthru
    _
  // Predicated region
  $region10: #{rnn_sequence.2} parent=0 // pred_check
    _
  $region11: #{rnn_sequence.2} parent=0 // pred_check_branch
    %13 = sbr.rel (0) target = $region13
  $region12: #{rnn_sequence.2} parent=0 // pred_region
    _
  $region13: #{rnn_sequence.2} parent=0 // pred_fallthru
    _
  %p14 = scmp.eq.s32.totalorder 0, 0
  // Predicated region
  $region14: #{rnn_sequence.2} parent=0 // pred_check
    %p15 = pneg %p14
  $region15: #{rnn_sequence.2} parent=0 // pred_check_branch
    %17 = sbr.rel (%p15) target = $region17
  $region16: #{rnn_sequence.2} parent=0 // pred_region
    %v18 = vld [vmem:[%s1] sm:$0xff]
    %19 = vst [vmem:[#allocation2] sm:$0xff] %v18
  $region17: #{rnn_sequence.2} parent=0 // pred_fallthru
    _
  %v20 = vld [vmem:[%s2] sm:$0xff]
  %v21 = vld [vmem:[%s2 + $0x8] sm:$0xff]
  %v22 = vld [vmem:[%s2 + $0x10] sm:$0xff]
  %v23 = vld [vmem:[%s2 + $0x18] sm:$0xff]
  %v24 = vld [vmem:[%s2 + $0x20] sm:$0xff]
  %v25 = vld [vmem:[%s2 + $0x28] sm:$0xff]
  %v26 = vld [vmem:[%s2 + $0x30] sm:$0xff]
  %v27 = vld [vmem:[%s2 + $0x38] sm:$0xff]
  %v28 = vld [vmem:[%s2 + $0x40] sm:$0xff]
  %v29 = vld [vmem:[%s2 + $0x48] sm:$0xff]
  %v30 = vld [vmem:[%s2 + $0x50] sm:$0xff]
  %v31 = vld [vmem:[%s2 + $0x58] sm:$0xff]
  %v32 = vld [vmem:[%s2 + $0x60] sm:$0xff]
  %v33 = vld [vmem:[%s2 + $0x68] sm:$0xff]
  %v34 = vld [vmem:[%s2 + $0x70] sm:$0xff]
  %v35 = vld [vmem:[%s2 + $0x78] sm:$0xff]
  %v36 = vld [vmem:[#allocation2] sm:$0xff]
  %v37 = vld [vmem:[%s0] sm:$0xff]
  %38 = vmatprep.subr.mxu0 0.0
  %39 = vmatpush1.msra.mxu0 %v20
  %40 = vmatprep.subr.mxu0 0.0
  %41 = vmatpush1.msra.mxu0 %v21
  %42 = vmatprep.subr.mxu0 0.0
  %43 = vmatpush1.msra.mxu0 %v22
  %44 = vmatprep.subr.mxu0 0.0
  %45 = vmatpush1.msra.mxu0 %v23
  %46 = vmatprep.subr.mxu0 0.0
  %47 = vmatpush1.msra.mxu0 %v24
  %48 = vmatprep.subr.mxu0 0.0
  %49 = vmatpush1.msra.mxu0 %v25
  %50 = vmatprep.subr.mxu0 0.0
  %51 = vmatpush1.msra.mxu0 %v26
  %52 = vmatprep.subr.mxu0 0.0
  %53 = vmatpush1.msra.mxu0 %v27
  %54 = vmatprep.subr.mxu0 0.0
  %55 = vmatpush1.msra.mxu0 %v28
  %56 = vmatprep.subr.mxu0 0.0
  %57 = vmatpush1.msra.mxu0 %v29
  %58 = vmatprep.subr.mxu0 0.0
  %59 = vmatpush1.msra.mxu0 %v30
  %60 = vmatprep.subr.mxu0 0.0
  %61 = vmatpush1.msra.mxu0 %v31
  %62 = vmatprep.subr.mxu0 0.0
  %63 = vmatpush1.msra.mxu0 %v32
  %64 = vmatprep.subr.mxu0 0.0
  %65 = vmatpush1.msra.mxu0 %v33
  %66 = vmatprep.subr.mxu0 0.0
  %67 = vmatpush1.msra.mxu0 %v34
  %68 = vmatprep.subr.mxu0 0.0
  %69 = vmatpush1.msra.mxu0 %v35
  %70 = vmatprep.subr.mxu0 0.0
  %71 = vmatpush1.msra.mxu0 0.0
  %72 = vmatprep.subr.mxu0 0.0
  %73 = vmatpush1.msra.mxu0 0.0
  %74 = vmatprep.subr.mxu0 0.0
  %75 = vmatpush1.msra.mxu0 0.0
  %76 = vmatprep.subr.mxu0 0.0
  %77 = vmatpush1.msra.mxu0 0.0
  %78 = vmatprep.subr.mxu0 0.0
  %79 = vmatpush1.msra.mxu0 0.0
  %80 = vmatprep.subr.mxu0 0.0
  %81 = vmatpush1.msra.mxu0 0.0
  %82 = vmatprep.subr.mxu0 0.0
  %83 = vmatpush1.msra.mxu0 0.0
  %84 = vmatprep.subr.mxu0 0.0
  %85 = vmatpush1.msra.mxu0 0.0
  %86 = vmatprep.subr.mxu0 0.0
  %87 = vmatpush1.msra.mxu0 0.0
  %88 = vmatprep.subr.mxu0 0.0
  %89 = vmatpush1.msra.mxu0 0.0
  %90 = vmatprep.subr.mxu0 0.0
  %91 = vmatpush1.msra.mxu0 0.0
  %92 = vmatprep.subr.mxu0 0.0
  %93 = vmatpush1.msra.mxu0 0.0
  %94 = vmatprep.subr.mxu0 0.0
  %95 = vmatpush1.msra.mxu0 0.0
  %96 = vmatprep.subr.mxu0 0.0
  %97 = vmatpush1.msra.mxu0 0.0
  %98 = vmatprep.subr.mxu0 0.0
  %99 = vmatpush1.msra.mxu0 0.0
  %100 = vmatprep.subr.mxu0 0.0
  %101 = vmatpush1.msra.mxu0 0.0
  %102 = vmatprep.mubr.f32.mxu0 0.0
  %103 = vmatmul.mubr.f32.gmra.mrb[0].mxu0 %v36
  %v104 = vpop.f32.mrb[0].mxu0
  %v105 = vadd.f32 0.0, %v104
  %v106 = vpop.f32.mrb[0].mxu0
  %107 = vdwg.mxu0
  %v108 = vadd.f32 %v37, %v105
  %109 = vst [vmem:[%s3] sm:$0xff] %v108
  %s110 = scalar_lea.vmem %s0, 8
  %v111 = vld [vmem:[%s110] sm:$0xff]
  %112 = vmatprep.subr.mxu0 0.0
  %113 = vmatpush1.msra.mxu0 %v20
  %114 = vmatprep.subr.mxu0 0.0
  %115 = vmatpush1.msra.mxu0 %v21
  %116 = vmatprep.subr.mxu0 0.0
  %117 = vmatpush1.msra.mxu0 %v22
  %118 = vmatprep.subr.mxu0 0.0
  %119 = vmatpush1.msra.mxu0 %v23
  %120 = vmatprep.subr.mxu0 0.0
  %121 = vmatpush1.msra.mxu0 %v24
  %122 = vmatprep.subr.mxu0 0.0
  %123 = vmatpush1.msra.mxu0 %v25
  %124 = vmatprep.subr.mxu0 0.0
  %125 = vmatpush1.msra.mxu0 %v26
  %126 = vmatprep.subr.mxu0 0.0
  %127 = vmatpush1.msra.mxu0 %v27
  %128 = vmatprep.subr.mxu0 0.0
  %129 = vmatpush1.msra.mxu0 %v28
  %130 = vmatprep.subr.mxu0 0.0
  %131 = vmatpush1.msra.mxu0 %v29
  %132 = vmatprep.subr.mxu0 0.0
  %133 = vmatpush1.msra.mxu0 %v30
  %134 = vmatprep.subr.mxu0 0.0
  %135 = vmatpush1.msra.mxu0 %v31
  %136 = vmatprep.subr.mxu0 0.0
  %137 = vmatpush1.msra.mxu0 %v32
  %138 = vmatprep.subr.mxu0 0.0
  %139 = vmatpush1.msra.mxu0 %v33
  %140 = vmatprep.subr.mxu0 0.0
  %141 = vmatpush1.msra.mxu0 %v34
  %142 = vmatprep.subr.mxu0 0.0
  %143 = vmatpush1.msra.mxu0 %v35
  %144 = vmatprep.subr.mxu0 0.0
  %145 = vmatpush1.msra.mxu0 0.0
  %146 = vmatprep.subr.mxu0 0.0
  %147 = vmatpush1.msra.mxu0 0.0
  %148 = vmatprep.subr.mxu0 0.0
  %149 = vmatpush1.msra.mxu0 0.0
  %150 = vmatprep.subr.mxu0 0.0
  %151 = vmatpush1.msra.mxu0 0.0
  %152 = vmatprep.subr.mxu0 0.0
  %153 = vmatpush1.msra.mxu0 0.0
  %154 = vmatprep.subr.mxu0 0.0
  %155 = vmatpush1.msra.mxu0 0.0
  %156 = vmatprep.subr.mxu0 0.0
  %157 = vmatpush1.msra.mxu0 0.0
  %158 = vmatprep.subr.mxu0 0.0
  %159 = vmatpush1.msra.mxu0 0.0
  %160 = vmatprep.subr.mxu0 0.0
  %161 = vmatpush1.msra.mxu0 0.0
  %162 = vmatprep.subr.mxu0 0.0
  %163 = vmatpush1.msra.mxu0 0.0
  %164 = vmatprep.subr.mxu0 0.0
  %165 = vmatpush1.msra.mxu0 0.0
  %166 = vmatprep.subr.mxu0 0.0
  %167 = vmatpush1.msra.mxu0 0.0
  %168 = vmatprep.subr.mxu0 0.0
  %169 = vmatpush1.msra.mxu0 0.0
  %170 = vmatprep.subr.mxu0 0.0
  %171 = vmatpush1.msra.mxu0 0.0
  %172 = vmatprep.subr.mxu0 0.0
  %173 = vmatpush1.msra.mxu0 0.0
  %174 = vmatprep.subr.mxu0 0.0
  %175 = vmatpush1.msra.mxu0 0.0
  %176 = vmatprep.mubr.f32.mxu0 0.0
  %177 = vmatmul.mubr.f32.gmra.mrb[0].mxu0 %v108
  %v178 = vpop.f32.mrb[0].mxu0
  %v179 = vadd.f32 0.0, %v178
  %v180 = vpop.f32.mrb[0].mxu0
  %181 = vdwg.mxu0
  %v182 = vadd.f32 %v111, %v179
  %s183 = scalar_lea.vmem %s3, 8
  %184 = vst [vmem:[%s183] sm:$0xff] %v182
  %s185 = scalar_lea.vmem %s0, 16
  %v186 = vld [vmem:[%s185] sm:$0xff]
  %187 = vmatprep.subr.mxu0 0.0
  %188 = vmatpush1.msra.mxu0 %v20
  %189 = vmatprep.subr.mxu0 0.0
  %190 = vmatpush1.msra.mxu0 %v21
  %191 = vmatprep.subr.mxu0 0.0
  %192 = vmatpush1.msra.mxu0 %v22
  %193 = vmatprep.subr.mxu0 0.0
  %194 = vmatpush1.msra.mxu0 %v23
  %195 = vmatprep.subr.mxu0 0.0
  %196 = vmatpush1.msra.mxu0 %v24
  %197 = vmatprep.subr.mxu0 0.0
  %198 = vmatpush1.msra.mxu0 %v25
  %199 = vmatprep.subr.mxu0 0.0
  %200 = vmatpush1.msra.mxu0 %v26
  %201 = vmatprep.subr.mxu0 0.0
  %202 = vmatpush1.msra.mxu0 %v27
  %203 = vmatprep.subr.mxu0 0.0
  %204 = vmatpush1.msra.mxu0 %v28
  %205 = vmatprep.subr.mxu0 0.0
  %206 = vmatpush1.msra.mxu0 %v29
  %207 = vmatprep.subr.mxu0 0.0
  %208 = vmatpush1.msra.mxu0 %v30
  %209 = vmatprep.subr.mxu0 0.0
  %210 = vmatpush1.msra.mxu0 %v31
  %211 = vmatprep.subr.mxu0 0.0
  %212 = vmatpush1.msra.mxu0 %v32
  %213 = vmatprep.subr.mxu0 0.0
  %214 = vmatpush1.msra.mxu0 %v33
  %215 = vmatprep.subr.mxu0 0.0
  %216 = vmatpush1.msra.mxu0 %v34
  %217 = vmatprep.subr.mxu0 0.0
  %218 = vmatpush1.msra.mxu0 %v35
  %219 = vmatprep.subr.mxu0 0.0
  %220 = vmatpush1.msra.mxu0 0.0
  %221 = vmatprep.subr.mxu0 0.0
  %222 = vmatpush1.msra.mxu0 0.0
  %223 = vmatprep.subr.mxu0 0.0
  %224 = vmatpush1.msra.mxu0 0.0
  %225 = vmatprep.subr.mxu0 0.0
  %226 = vmatpush1.msra.mxu0 0.0
  %227 = vmatprep.subr.mxu0 0.0
  %228 = vmatpush1.msra.mxu0 0.0
  %229 = vmatprep.subr.mxu0 0.0
  %230 = vmatpush1.msra.mxu0 0.0
  %231 = vmatprep.subr.mxu0 0.0
  %232 = vmatpush1.msra.mxu0 0.0
  %233 = vmatprep.subr.mxu0 0.0
  %234 = vmatpush1.msra.mxu0 0.0
  %235 = vmatprep.subr.mxu0 0.0
  %236 = vmatpush1.msra.mxu0 0.0
  %237 = vmatprep.subr.mxu0 0.0
  %238 = vmatpush1.msra.mxu0 0.0
  %239 = vmatprep.subr.mxu0 0.0
  %240 = vmatpush1.msra.mxu0 0.0
  %241 = vmatprep.subr.mxu0 0.0
  %242 = vmatpush1.msra.mxu0 0.0
  %243 = vmatprep.subr.mxu0 0.0
  %244 = vmatpush1.msra.mxu0 0.0
  %245 = vmatprep.subr.mxu0 0.0
  %246 = vmatpush1.msra.mxu0 0.0
  %247 = vmatprep.subr.mxu0 0.0
  %248 = vmatpush1.msra.mxu0 0.0
  %249 = vmatprep.subr.mxu0 0.0
  %250 = vmatpush1.msra.mxu0 0.0
  %251 = vmatprep.mubr.f32.mxu0 0.0
  %252 = vmatmul.mubr.f32.gmra.mrb[0].mxu0 %v182
  %v253 = vpop.f32.mrb[0].mxu0
  %v254 = vadd.f32 0.0, %v253
  %v255 = vpop.f32.mrb[0].mxu0
  %256 = vdwg.mxu0
  %v257 = vadd.f32 %v186, %v254
  %s258 = scalar_lea.vmem %s3, 16
  %259 = vst [vmem:[%s258] sm:$0xff] %v257
  %s260 = scalar_lea.vmem %s0, 24
  %v261 = vld [vmem:[%s260] sm:$0xff]
  %262 = vmatprep.subr.mxu0 0.0
  %263 = vmatpush1.msra.mxu0 %v20
  %264 = vmatprep.subr.mxu0 0.0
  %265 = vmatpush1.msra.mxu0 %v21
  %266 = vmatprep.subr.mxu0 0.0
  %267 = vmatpush1.msra.mxu0 %v22
  %268 = vmatprep.subr.mxu0 0.0
  %269 = vmatpush1.msra.mxu0 %v23
  %270 = vmatprep.subr.mxu0 0.0
  %271 = vmatpush1.msra.mxu0 %v24
  %272 = vmatprep.subr.mxu0 0.0
  %273 = vmatpush1.msra.mxu0 %v25
  %274 = vmatprep.subr.mxu0 0.0
  %275 = vmatpush1.msra.mxu0 %v26
  %276 = vmatprep.subr.mxu0 0.0
  %277 = vmatpush1.msra.mxu0 %v27
  %278 = vmatprep.subr.mxu0 0.0
  %279 = vmatpush1.msra.mxu0 %v28
  %280 = vmatprep.subr.mxu0 0.0
  %281 = vmatpush1.msra.mxu0 %v29
  %282 = vmatprep.subr.mxu0 0.0
  %283 = vmatpush1.msra.mxu0 %v30
  %284 = vmatprep.subr.mxu0 0.0
  %285 = vmatpush1.msra.mxu0 %v31
  %286 = vmatprep.subr.mxu0 0.0
  %287 = vmatpush1.msra.mxu0 %v32
  %288 = vmatprep.subr.mxu0 0.0
  %289 = vmatpush1.msra.mxu0 %v33
  %290 = vmatprep.subr.mxu0 0.0
  %291 = vmatpush1.msra.mxu0 %v34
  %292 = vmatprep.subr.mxu0 0.0
  %293 = vmatpush1.msra.mxu0 %v35
  %294 = vmatprep.subr.mxu0 0.0
  %295 = vmatpush1.msra.mxu0 0.0
  %296 = vmatprep.subr.mxu0 0.0
  %297 = vmatpush1.msra.mxu0 0.0
  %298 = vmatprep.subr.mxu0 0.0
  %299 = vmatpush1.msra.mxu0 0.0
  %300 = vmatprep.subr.mxu0 0.0
  %301 = vmatpush1.msra.mxu0 0.0
  %302 = vmatprep.subr.mxu0 0.0
  %303 = vmatpush1.msra.mxu0 0.0
  %304 = vmatprep.subr.mxu0 0.0
  %305 = vmatpush1.msra.mxu0 0.0
  %306 = vmatprep.subr.mxu0 0.0
  %307 = vmatpush1.msra.mxu0 0.0
  %308 = vmatprep.subr.mxu0 0.0
  %309 = vmatpush1.msra.mxu0 0.0
  %310 = vmatprep.subr.mxu0 0.0
  %311 = vmatpush1.msra.mxu0 0.0
  %312 = vmatprep.subr.mxu0 0.0
  %313 = vmatpush1.msra.mxu0 0.0
  %314 = vmatprep.subr.mxu0 0.0
  %315 = vmatpush1.msra.mxu0 0.0
  %316 = vmatprep.subr.mxu0 0.0
  %317 = vmatpush1.msra.mxu0 0.0
  %318 = vmatprep.subr.mxu0 0.0
  %319 = vmatpush1.msra.mxu0 0.0
  %320 = vmatprep.subr.mxu0 0.0
  %321 = vmatpush1.msra.mxu0 0.0
  %322 = vmatprep.subr.mxu0 0.0
  %323 = vmatpush1.msra.mxu0 0.0
  %324 = vmatprep.subr.mxu0 0.0
  %325 = vmatpush1.msra.mxu0 0.0
  %326 = vmatprep.mubr.f32.mxu0 0.0
  %327 = vmatmul.mubr.f32.gmra.mrb[0].mxu0 %v257
  %v328 = vpop.f32.mrb[0].mxu0
  %v329 = vadd.f32 0.0, %v328
  %v330 = vpop.f32.mrb[0].mxu0
  %331 = vdwg.mxu0
  %v332 = vadd.f32 %v261, %v329
  %s333 = scalar_lea.vmem %s3, 24
  %334 = vst [vmem:[%s333] sm:$0xff] %v332
  %s335 = scalar_lea.vmem %s0, 32
  %v336 = vld [vmem:[%s335] sm:$0xff]
  %337 = vmatprep.subr.mxu0 0.0
  %338 = vmatpush1.msra.mxu0 %v20
  %339 = vmatprep.subr.mxu0 0.0
  %340 = vmatpush1.msra.mxu0 %v21
  %341 = vmatprep.subr.mxu0 0.0
  %342 = vmatpush1.msra.mxu0 %v22
  %343 = vmatprep.subr.mxu0 0.0
  %344 = vmatpush1.msra.mxu0 %v23
  %345 = vmatprep.subr.mxu0 0.0
  %346 = vmatpush1.msra.mxu0 %v24
  %347 = vmatprep.subr.mxu0 0.0
  %348 = vmatpush1.msra.mxu0 %v25
  %349 = vmatprep.subr.mxu0 0.0
  %350 = vmatpush1.msra.mxu0 %v26
  %351 = vmatprep.subr.mxu0 0.0
  %352 = vmatpush1.msra.mxu0 %v27
  %353 = vmatprep.subr.mxu0 0.0
  %354 = vmatpush1.msra.mxu0 %v28
  %355 = vmatprep.subr.mxu0 0.0
  %356 = vmatpush1.msra.mxu0 %v29
  %357 = vmatprep.subr.mxu0 0.0
  %358 = vmatpush1.msra.mxu0 %v30
  %359 = vmatprep.subr.mxu0 0.0
  %360 = vmatpush1.msra.mxu0 %v31
  %361 = vmatprep.subr.mxu0 0.0
  %362 = vmatpush1.msra.mxu0 %v32
  %363 = vmatprep.subr.mxu0 0.0
  %364 = vmatpush1.msra.mxu0 %v33
  %365 = vmatprep.subr.mxu0 0.0
  %366 = vmatpush1.msra.mxu0 %v34
  %367 = vmatprep.subr.mxu0 0.0
  %368 = vmatpush1.msra.mxu0 %v35
  %369 = vmatprep.subr.mxu0 0.0
  %370 = vmatpush1.msra.mxu0 0.0
  %371 = vmatprep.subr.mxu0 0.0
  %372 = vmatpush1.msra.mxu0 0.0
  %373 = vmatprep.subr.mxu0 0.0
  %374 = vmatpush1.msra.mxu0 0.0
  %375 = vmatprep.subr.mxu0 0.0
  %376 = vmatpush1.msra.mxu0 0.0
  %377 = vmatprep.subr.mxu0 0.0
  %378 = vmatpush1.msra.mxu0 0.0
  %379 = vmatprep.subr.mxu0 0.0
  %380 = vmatpush1.msra.mxu0 0.0
  %381 = vmatprep.subr.mxu0 0.0
  %382 = vmatpush1.msra.mxu0 0.0
  %383 = vmatprep.subr.mxu0 0.0
  %384 = vmatpush1.msra.mxu0 0.0
  %385 = vmatprep.subr.mxu0 0.0
  %386 = vmatpush1.msra.mxu0 0.0
  %387 = vmatprep.subr.mxu0 0.0
  %388 = vmatpush1.msra.mxu0 0.0
  %389 = vmatprep.subr.mxu0 0.0
  %390 = vmatpush1.msra.mxu0 0.0
  %391 = vmatprep.subr.mxu0 0.0
  %392 = vmatpush1.msra.mxu0 0.0
  %393 = vmatprep.subr.mxu0 0.0
  %394 = vmatpush1.msra.mxu0 0.0
  %395 = vmatprep.subr.mxu0 0.0
  %396 = vmatpush1.msra.mxu0 0.0
  %397 = vmatprep.subr.mxu0 0.0
  %398 = vmatpush1.msra.mxu0 0.0
  %399 = vmatprep.subr.mxu0 0.0
  %400 = vmatpush1.msra.mxu0 0.0
  %401 = vmatprep.mubr.f32.mxu0 0.0
  %402 = vmatmul.mubr.f32.gmra.mrb[0].mxu0 %v332
  %v403 = vpop.f32.mrb[0].mxu0
  %v404 = vadd.f32 0.0, %v403
  %v405 = vpop.f32.mrb[0].mxu0
  %406 = vdwg.mxu0
  %v407 = vadd.f32 %v336, %v404
  %s408 = scalar_lea.vmem %s3, 32
  %409 = vst [vmem:[%s408] sm:$0xff] %v407
  %s410 = scalar_lea.vmem %s0, 40
  %v411 = vld [vmem:[%s410] sm:$0xff]
  %412 = vmatprep.subr.mxu0 0.0
  %413 = vmatpush1.msra.mxu0 %v20
  %414 = vmatprep.subr.mxu0 0.0
  %415 = vmatpush1.msra.mxu0 %v21
  %416 = vmatprep.subr.mxu0 0.0
  %417 = vmatpush1.msra.mxu0 %v22
  %418 = vmatprep.subr.mxu0 0.0
  %419 = vmatpush1.msra.mxu0 %v23
  %420 = vmatprep.subr.mxu0 0.0
  %421 = vmatpush1.msra.mxu0 %v24
  %422 = vmatprep.subr.mxu0 0.0
  %423 = vmatpush1.msra.mxu0 %v25
  %424 = vmatprep.subr.mxu0 0.0
  %425 = vmatpush1.msra.mxu0 %v26
  %426 = vmatprep.subr.mxu0 0.0
  %427 = vmatpush1.msra.mxu0 %v27
  %428 = vmatprep.subr.mxu0 0.0
  %429 = vmatpush1.msra.mxu0 %v28
  %430 = vmatprep.subr.mxu0 0.0
  %431 = vmatpush1.msra.mxu0 %v29
  %432 = vmatprep.subr.mxu0 0.0
  %433 = vmatpush1.msra.mxu0 %v30
  %434 = vmatprep.subr.mxu0 0.0
  %435 = vmatpush1.msra.mxu0 %v31
  %436 = vmatprep.subr.mxu0 0.0
  %437 = vmatpush1.msra.mxu0 %v32
  %438 = vmatprep.subr.mxu0 0.0
  %439 = vmatpush1.msra.mxu0 %v33
  %440 = vmatprep.subr.mxu0 0.0
  %441 = vmatpush1.msra.mxu0 %v34
  %442 = vmatprep.subr.mxu0 0.0
  %443 = vmatpush1.msra.mxu0 %v35
  %444 = vmatprep.subr.mxu0 0.0
  %445 = vmatpush1.msra.mxu0 0.0
  %446 = vmatprep.subr.mxu0 0.0
  %447 = vmatpush1.msra.mxu0 0.0
  %448 = vmatprep.subr.mxu0 0.0
  %449 = vmatpush1.msra.mxu0 0.0
  %450 = vmatprep.subr.mxu0 0.0
  %451 = vmatpush1.msra.mxu0 0.0
  %452 = vmatprep.subr.mxu0 0.0
  %453 = vmatpush1.msra.mxu0 0.0
  %454 = vmatprep.subr.mxu0 0.0
  %455 = vmatpush1.msra.mxu0 0.0
  %456 = vmatprep.subr.mxu0 0.0
  %457 = vmatpush1.msra.mxu0 0.0
  %458 = vmatprep.subr.mxu0 0.0
  %459 = vmatpush1.msra.mxu0 0.0
  %460 = vmatprep.subr.mxu0 0.0
  %461 = vmatpush1.msra.mxu0 0.0
  %462 = vmatprep.subr.mxu0 0.0
  %463 = vmatpush1.msra.mxu0 0.0
  %464 = vmatprep.subr.mxu0 0.0
  %465 = vmatpush1.msra.mxu0 0.0
  %466 = vmatprep.subr.mxu0 0.0
  %467 = vmatpush1.msra.mxu0 0.0
  %468 = vmatprep.subr.mxu0 0.0
  %469 = vmatpush1.msra.mxu0 0.0
  %470 = vmatprep.subr.mxu0 0.0
  %471 = vmatpush1.msra.mxu0 0.0
  %472 = vmatprep.subr.mxu0 0.0
  %473 = vmatpush1.msra.mxu0 0.0
  %474 = vmatprep.subr.mxu0 0.0
  %475 = vmatpush1.msra.mxu0 0.0
  %476 = vmatprep.mubr.f32.mxu0 0.0
  %477 = vmatmul.mubr.f32.gmra.mrb[0].mxu0 %v407
  %v478 = vpop.f32.mrb[0].mxu0
  %v479 = vadd.f32 0.0, %v478
  %v480 = vpop.f32.mrb[0].mxu0
  %481 = vdwg.mxu0
  %v482 = vadd.f32 %v411, %v479
  %s483 = scalar_lea.vmem %s3, 40
  %484 = vst [vmem:[%s483] sm:$0xff] %v482
  %s485 = scalar_lea.vmem %s0, 48
  %v486 = vld [vmem:[%s485] sm:$0xff]
  %487 = vmatprep.subr.mxu0 0.0
  %488 = vmatpush1.msra.mxu0 %v20
  %489 = vmatprep.subr.mxu0 0.0
  %490 = vmatpush1.msra.mxu0 %v21
  %491 = vmatprep.subr.mxu0 0.0
  %492 = vmatpush1.msra.mxu0 %v22
  %493 = vmatprep.subr.mxu0 0.0
  %494 = vmatpush1.msra.mxu0 %v23
  %495 = vmatprep.subr.mxu0 0.0
  %496 = vmatpush1.msra.mxu0 %v24
  %497 = vmatprep.subr.mxu0 0.0
  %498 = vmatpush1.msra.mxu0 %v25
  %499 = vmatprep.subr.mxu0 0.0
  %500 = vmatpush1.msra.mxu0 %v26
  %501 = vmatprep.subr.mxu0 0.0
  %502 = vmatpush1.msra.mxu0 %v27
  %503 = vmatprep.subr.mxu0 0.0
  %504 = vmatpush1.msra.mxu0 %v28
  %505 = vmatprep.subr.mxu0 0.0
  %506 = vmatpush1.msra.mxu0 %v29
  %507 = vmatprep.subr.mxu0 0.0
  %508 = vmatpush1.msra.mxu0 %v30
  %509 = vmatprep.subr.mxu0 0.0
  %510 = vmatpush1.msra.mxu0 %v31
  %511 = vmatprep.subr.mxu0 0.0
  %512 = vmatpush1.msra.mxu0 %v32
  %513 = vmatprep.subr.mxu0 0.0
  %514 = vmatpush1.msra.mxu0 %v33
  %515 = vmatprep.subr.mxu0 0.0
  %516 = vmatpush1.msra.mxu0 %v34
  %517 = vmatprep.subr.mxu0 0.0
  %518 = vmatpush1.msra.mxu0 %v35
  %519 = vmatprep.subr.mxu0 0.0
  %520 = vmatpush1.msra.mxu0 0.0
  %521 = vmatprep.subr.mxu0 0.0
  %522 = vmatpush1.msra.mxu0 0.0
  %523 = vmatprep.subr.mxu0 0.0
  %524 = vmatpush1.msra.mxu0 0.0
  %525 = vmatprep.subr.mxu0 0.0
  %526 = vmatpush1.msra.mxu0 0.0
  %527 = vmatprep.subr.mxu0 0.0
  %528 = vmatpush1.msra.mxu0 0.0
  %529 = vmatprep.subr.mxu0 0.0
  %530 = vmatpush1.msra.mxu0 0.0
  %531 = vmatprep.subr.mxu0 0.0
  %532 = vmatpush1.msra.mxu0 0.0
  %533 = vmatprep.subr.mxu0 0.0
  %534 = vmatpush1.msra.mxu0 0.0
  %535 = vmatprep.subr.mxu0 0.0
  %536 = vmatpush1.msra.mxu0 0.0
  %537 = vmatprep.subr.mxu0 0.0
  %538 = vmatpush1.msra.mxu0 0.0
  %539 = vmatprep.subr.mxu0 0.0
  %540 = vmatpush1.msra.mxu0 0.0
  %541 = vmatprep.subr.mxu0 0.0
  %542 = vmatpush1.msra.mxu0 0.0
  %543 = vmatprep.subr.mxu0 0.0
  %544 = vmatpush1.msra.mxu0 0.0
  %545 = vmatprep.subr.mxu0 0.0
  %546 = vmatpush1.msra.mxu0 0.0
  %547 = vmatprep.subr.mxu0 0.0
  %548 = vmatpush1.msra.mxu0 0.0
  %549 = vmatprep.subr.mxu0 0.0
  %550 = vmatpush1.msra.mxu0 0.0
  %551 = vmatprep.mubr.f32.mxu0 0.0
  %552 = vmatmul.mubr.f32.gmra.mrb[0].mxu0 %v482
  %v553 = vpop.f32.mrb[0].mxu0
  %v554 = vadd.f32 0.0, %v553
  %v555 = vpop.f32.mrb[0].mxu0
  %556 = vdwg.mxu0
  %v557 = vadd.f32 %v486, %v554
  %s558 = scalar_lea.vmem %s3, 48
  %559 = vst [vmem:[%s558] sm:$0xff] %v557
  %s560 = scalar_lea.vmem %s0, 56
  %v561 = vld [vmem:[%s560] sm:$0xff]
  %562 = vmatprep.subr.mxu0 0.0
  %563 = vmatpush1.msra.mxu0 %v20
  %564 = vmatprep.subr.mxu0 0.0
  %565 = vmatpush1.msra.mxu0 %v21
  %566 = vmatprep.subr.mxu0 0.0
  %567 = vmatpush1.msra.mxu0 %v22
  %568 = vmatprep.subr.mxu0 0.0
  %569 = vmatpush1.msra.mxu0 %v23
  %570 = vmatprep.subr.mxu0 0.0
  %571 = vmatpush1.msra.mxu0 %v24
  %572 = vmatprep.subr.mxu0 0.0
  %573 = vmatpush1.msra.mxu0 %v25
  %574 = vmatprep.subr.mxu0 0.0
  %575 = vmatpush1.msra.mxu0 %v26
  %576 = vmatprep.subr.mxu0 0.0
  %577 = vmatpush1.msra.mxu0 %v27
  %578 = vmatprep.subr.mxu0 0.0
  %579 = vmatpush1.msra.mxu0 %v28
  %580 = vmatprep.subr.mxu0 0.0
  %581 = vmatpush1.msra.mxu0 %v29
  %582 = vmatprep.subr.mxu0 0.0
  %583 = vmatpush1.msra.mxu0 %v30
  %584 = vmatprep.subr.mxu0 0.0
  %585 = vmatpush1.msra.mxu0 %v31
  %586 = vmatprep.subr.mxu0 0.0
  %587 = vmatpush1.msra.mxu0 %v32
  %588 = vmatprep.subr.mxu0 0.0
  %589 = vmatpush1.msra.mxu0 %v33
  %590 = vmatprep.subr.mxu0 0.0
  %591 = vmatpush1.msra.mxu0 %v34
  %592 = vmatprep.subr.mxu0 0.0
  %593 = vmatpush1.msra.mxu0 %v35
  %594 = vmatprep.subr.mxu0 0.0
  %595 = vmatpush1.msra.mxu0 0.0
  %596 = vmatprep.subr.mxu0 0.0
  %597 = vmatpush1.msra.mxu0 0.0
  %598 = vmatprep.subr.mxu0 0.0
  %599 = vmatpush1.msra.mxu0 0.0
  %600 = vmatprep.subr.mxu0 0.0
  %601 = vmatpush1.msra.mxu0 0.0
  %602 = vmatprep.subr.mxu0 0.0
  %603 = vmatpush1.msra.mxu0 0.0
  %604 = vmatprep.subr.mxu0 0.0
  %605 = vmatpush1.msra.mxu0 0.0
  %606 = vmatprep.subr.mxu0 0.0
  %607 = vmatpush1.msra.mxu0 0.0
  %608 = vmatprep.subr.mxu0 0.0
  %609 = vmatpush1.msra.mxu0 0.0
  %610 = vmatprep.subr.mxu0 0.0
  %611 = vmatpush1.msra.mxu0 0.0
  %612 = vmatprep.subr.mxu0 0.0
  %613 = vmatpush1.msra.mxu0 0.0
  %614 = vmatprep.subr.mxu0 0.0
  %615 = vmatpush1.msra.mxu0 0.0
  %616 = vmatprep.subr.mxu0 0.0
  %617 = vmatpush1.msra.mxu0 0.0
  %618 = vmatprep.subr.mxu0 0.0
  %619 = vmatpush1.msra.mxu0 0.0
  %620 = vmatprep.subr.mxu0 0.0
  %621 = vmatpush1.msra.mxu0 0.0
  %622 = vmatprep.subr.mxu0 0.0
  %623 = vmatpush1.msra.mxu0 0.0
  %624 = vmatprep.subr.mxu0 0.0
  %625 = vmatpush1.msra.mxu0 0.0
  %626 = vmatprep.mubr.f32.mxu0 0.0
  %627 = vmatmul.mubr.f32.gmra.mrb[0].mxu0 %v557
  %v628 = vpop.f32.mrb[0].mxu0
  %v629 = vadd.f32 0.0, %v628
  %v630 = vpop.f32.mrb[0].mxu0
  %631 = vdwg.mxu0
  %v632 = vadd.f32 %v561, %v629
  %s633 = scalar_lea.vmem %s3, 56
  %634 = vst [vmem:[%s633] sm:$0xff] %v632
  %635 = vst [vmem:[#allocation2] sm:$0xff] %v632
  // Predicated region
  $region18: #{rnn_sequence.2} parent=0 // pred_check
    _
  $region19: #{rnn_sequence.2} parent=0 // pred_check_branch
    %637 = sbr.rel (0) target = $region21
  $region20: #{rnn_sequence.2} parent=0 // pred_region
    _
  $region21: #{rnn_sequence.2} parent=0 // pred_fallthru
    _
  // Predicated region
  $region22: #{rnn_sequence.2} parent=0 // pred_check
    _
  $region23: #{rnn_sequence.2} parent=0 // pred_check_branch
    %639 = sbr.rel (0) target = $region25
  $region24: #{rnn_sequence.2} parent=0 // pred_region
    _
  $region25: #{rnn_sequence.2} parent=0 // pred_fallthru
    _

// kernel: rnn_sequence.3
$region0: #{rnn_sequence.3}
  #allocation0 [shape = 'u32[]', space=smem, size = 0x4, offset = 0x4, fixed_abs, tag = 'smem constant byte address 0x4 - core index']
  #allocation1 [shape = 'u32[144,128]{1,0:T(1,128)}', space=vmem, size = 0x12000, scoped, tag = 'internal scratch']
  %s0 = inlined_call_operand.vmem [shape: f32[64,128], index: 0, kind: input, shape index: {}]
  %s1 = inlined_call_operand.vmem [shape: f32[64,128], index: 1, kind: input, shape index: {}]
  %s2 = inlined_call_operand.vmem [shape: f32[64,128], index: 2, kind: input, shape index: {}]
  %s3 = inlined_call_operand.vmem [shape: f32[128,128], index: 3, kind: input, shape index: {}]
  %s4 = inlined_call_operand.vmem [shape: f32[128,128], index: 4, kind: input, shape index: {}]
  %s5 = inlined_call_operand.vmem [shape: f32[128,128], index: 5, kind: input, shape index: {}]
  %s6 = inlined_call_operand.vmem [shape: f32[1,128], index: 6, kind: input, shape index: {}]
  %s7 = inlined_call_operand.vmem [shape: f32[64,128], index: 7, kind: output, shape index: {}]
  %s8 = sld [smem:[#allocation0]]
  $region38: #{rnn_sequence.3} parent=0
    _
  %s10 = ssub.s32 1, %s8
  %s11 = scalar_select 0, %s10, %s8
  // Predicated region
  $region2: #{rnn_sequence.3} parent=0 // pred_check
    _
  $region3: #{rnn_sequence.3} parent=0 // pred_check_branch
    %13 = sbr.rel (0) target = $region5
  $region4: #{rnn_sequence.3} parent=0 // pred_region
    _
  $region5: #{rnn_sequence.3} parent=0 // pred_fallthru
    _
  // Predicated region
  $region6: #{rnn_sequence.3} parent=0 // pred_check
    _
  $region7: #{rnn_sequence.3} parent=0 // pred_check_branch
    %15 = sbr.rel (0) target = $region9
  $region8: #{rnn_sequence.3} parent=0 // pred_region
    _
  $region9: #{rnn_sequence.3} parent=0 // pred_fallthru
    _
  // Predicated region
  $region10: #{rnn_sequence.3} parent=0 // pred_check
    _
  $region11: #{rnn_sequence.3} parent=0 // pred_check_branch
    %17 = sbr.rel (0) target = $region13
  $region12: #{rnn_sequence.3} parent=0 // pred_region
    _
  $region13: #{rnn_sequence.3} parent=0 // pred_fallthru
    _
  // Predicated region
  $region14: #{rnn_sequence.3} parent=0 // pred_check
    _
  $region15: #{rnn_sequence.3} parent=0 // pred_check_branch
    %19 = sbr.rel (0) target = $region17
  $region16: #{rnn_sequence.3} parent=0 // pred_region
    _
  $region17: #{rnn_sequence.3} parent=0 // pred_fallthru
    _
  // Predicated region
  $region18: #{rnn_sequence.3} parent=0 // pred_check
    _
  $region19: #{rnn_sequence.3} parent=0 // pred_check_branch
    %21 = sbr.rel (0) target = $region21
  $region20: #{rnn_sequence.3} parent=0 // pred_region
    _
  $region21: #{rnn_sequence.3} parent=0 // pred_fallthru
    _
  // Predicated region
  $region22: #{rnn_sequence.3} parent=0 // pred_check
    _
  $region23: #{rnn_sequence.3} parent=0 // pred_check_branch
    %23 = sbr.rel (0) target = $region25
  $region24: #{rnn_sequence.3} parent=0 // pred_region
    _
  $region25: #{rnn_sequence.3} parent=0 // pred_fallthru
    _
  // Predicated region
  $region26: #{rnn_sequence.3} parent=0 // pred_check
    _
  $region27: #{rnn_sequence.3} parent=0 // pred_check_branch
    %25 = sbr.rel (0) target = $region29
  $region28: #{rnn_sequence.3} parent=0 // pred_region
    _
  $region29: #{rnn_sequence.3} parent=0 // pred_fallthru
    _
  %v26 = vld [vmem:[%s2] sm:$0xff]
  %v27 = vld [vmem:[%s2 + $0x8] sm:$0xff]
  %v28 = vld [vmem:[%s2 + $0x10] sm:$0xff]
  %v29 = vld [vmem:[%s2 + $0x18] sm:$0xff]
  %v30 = vld [vmem:[%s2 + $0x20] sm:$0xff]
  %v31 = vld [vmem:[%s2 + $0x28] sm:$0xff]
  %v32 = vld [vmem:[%s2 + $0x30] sm:$0xff]
  %v33 = vld [vmem:[%s2 + $0x38] sm:$0xff]
  %v34 = vld [vmem:[%s1] sm:$0xff]
  %v35 = vld [vmem:[%s1 + $0x8] sm:$0xff]
  %v36 = vld [vmem:[%s1 + $0x10] sm:$0xff]
  %v37 = vld [vmem:[%s1 + $0x18] sm:$0xff]
  %v38 = vld [vmem:[%s1 + $0x20] sm:$0xff]
  %v39 = vld [vmem:[%s1 + $0x28] sm:$0xff]
  %v40 = vld [vmem:[%s1 + $0x30] sm:$0xff]
  %v41 = vld [vmem:[%s1 + $0x38] sm:$0xff]
  %v42 = vld [vmem:[%s3] sm:$0xff]
  %v43 = vld [vmem:[%s3 + $0x8] sm:$0xff]
  %v44 = vld [vmem:[%s3 + $0x10] sm:$0xff]
  %v45 = vld [vmem:[%s3 + $0x18] sm:$0xff]
  %v46 = vld [vmem:[%s3 + $0x20] sm:$0xff]
  %v47 = vld [vmem:[%s3 + $0x28] sm:$0xff]
  %v48 = vld [vmem:[%s3 + $0x30] sm:$0xff]
  %v49 = vld [vmem:[%s3 + $0x38] sm:$0xff]
  %v50 = vld [vmem:[%s3 + $0x40] sm:$0xff]
  %v51 = vld [vmem:[%s3 + $0x48] sm:$0xff]
  %v52 = vld [vmem:[%s3 + $0x50] sm:$0xff]
  %v53 = vld [vmem:[%s3 + $0x58] sm:$0xff]
  %v54 = vld [vmem:[%s3 + $0x60] sm:$0xff]
  %v55 = vld [vmem:[%s3 + $0x68] sm:$0xff]
  %v56 = vld [vmem:[%s3 + $0x70] sm:$0xff]
  %v57 = vld [vmem:[%s3 + $0x78] sm:$0xff]
  %58 = vmatprep.subr.mxu0 0.0
  %59 = vmatpush1.msra.mxu0 %v42
  %60 = vmatprep.subr.mxu0 0.0
  %61 = vmatpush1.msra.mxu0 %v43
  %62 = vmatprep.subr.mxu0 0.0
  %63 = vmatpush1.msra.mxu0 %v44
  %64 = vmatprep.subr.mxu0 0.0
  %65 = vmatpush1.msra.mxu0 %v45
  %66 = vmatprep.subr.mxu0 0.0
  %67 = vmatpush1.msra.mxu0 %v46
  %68 = vmatprep.subr.mxu0 0.0
  %69 = vmatpush1.msra.mxu0 %v47
  %70 = vmatprep.subr.mxu0 0.0
  %71 = vmatpush1.msra.mxu0 %v48
  %72 = vmatprep.subr.mxu0 0.0
  %73 = vmatpush1.msra.mxu0 %v49
  %74 = vmatprep.subr.mxu0 0.0
  %75 = vmatpush1.msra.mxu0 %v50
  %76 = vmatprep.subr.mxu0 0.0
  %77 = vmatpush1.msra.mxu0 %v51
  %78 = vmatprep.subr.mxu0 0.0
  %79 = vmatpush1.msra.mxu0 %v52
  %80 = vmatprep.subr.mxu0 0.0
  %81 = vmatpush1.msra.mxu0 %v53
  %82 = vmatprep.subr.mxu0 0.0
  %83 = vmatpush1.msra.mxu0 %v54
  %84 = vmatprep.subr.mxu0 0.0
  %85 = vmatpush1.msra.mxu0 %v55
  %86 = vmatprep.subr.mxu0 0.0
  %87 = vmatpush1.msra.mxu0 %v56
  %88 = vmatprep.subr.mxu0 0.0
  %89 = vmatpush1.msra.mxu0 %v57
  %90 = vmatprep.subr.mxu0 0.0
  %91 = vmatpush1.msra.mxu0 0.0
  %92 = vmatprep.subr.mxu0 0.0
  %93 = vmatpush1.msra.mxu0 0.0
  %94 = vmatprep.subr.mxu0 0.0
  %95 = vmatpush1.msra.mxu0 0.0
  %96 = vmatprep.subr.mxu0 0.0
  %97 = vmatpush1.msra.mxu0 0.0
  %98 = vmatprep.subr.mxu0 0.0
  %99 = vmatpush1.msra.mxu0 0.0
  %100 = vmatprep.subr.mxu0 0.0
  %101 = vmatpush1.msra.mxu0 0.0
  %102 = vmatprep.subr.mxu0 0.0
  %103 = vmatpush1.msra.mxu0 0.0
  %104 = vmatprep.subr.mxu0 0.0
  %105 = vmatpush1.msra.mxu0 0.0
  %106 = vmatprep.subr.mxu0 0.0
  %107 = vmatpush1.msra.mxu0 0.0
  %108 = vmatprep.subr.mxu0 0.0
  %109 = vmatpush1.msra.mxu0 0.0
  %110 = vmatprep.subr.mxu0 0.0
  %111 = vmatpush1.msra.mxu0 0.0
  %112 = vmatprep.subr.mxu0 0.0
  %113 = vmatpush1.msra.mxu0 0.0
  %114 = vmatprep.subr.mxu0 0.0
  %115 = vmatpush1.msra.mxu0 0.0
  %116 = vmatprep.subr.mxu0 0.0
  %117 = vmatpush1.msra.mxu0 0.0
  %118 = vmatprep.subr.mxu0 0.0
  %119 = vmatpush1.msra.mxu0 0.0
  %120 = vmatprep.subr.mxu0 0.0
  %121 = vmatpush1.msra.mxu0 0.0
  %122 = vmatprep.mubr.f32.mxu0 0.0
  %123 = vmatmul.mubr.f32.gmra.mrb[0].mxu0 %v34
  %v124 = vpop.f32.mrb[0].mxu0
  %v125 = vadd.f32 0.0, %v124
  %v126 = vpop.f32.mrb[0].mxu0
  %127 = vmatprep.mubr.f32.mxu0 0.0
  %128 = vmatmul.mubr.f32.gmra.mrb[0].mxu0 %v35
  %v129 = vpop.f32.mrb[0].mxu0
  %v130 = vadd.f32 0.0, %v129
  %v131 = vpop.f32.mrb[0].mxu0
  %132 = vmatprep.mubr.f32.mxu0 0.0
  %133 = vmatmul.mubr.f32.gmra.mrb[0].mxu0 %v36
  %v134 = vpop.f32.mrb[0].mxu0
  %v135 = vadd.f32 0.0, %v134
  %v136 = vpop.f32.mrb[0].mxu0
  %137 = vmatprep.mubr.f32.mxu0 0.0
  %138 = vmatmul.mubr.f32.gmra.mrb[0].mxu0 %v37
  %v139 = vpop.f32.mrb[0].mxu0
  %v140 = vadd.f32 0.0, %v139
  %v141 = vpop.f32.mrb[0].mxu0
  %142 = vmatprep.mubr.f32.mxu0 0.0
  %143 = vmatmul.mubr.f32.gmra.mrb[0].mxu0 %v38
  %v144 = vpop.f32.mrb[0].mxu0
  %v145 = vadd.f32 0.0, %v144
  %v146 = vpop.f32.mrb[0].mxu0
  %147 = vmatprep.mubr.f32.mxu0 0.0
  %148 = vmatmul.mubr.f32.gmra.mrb[0].mxu0 %v39
  %v149 = vpop.f32.mrb[0].mxu0
  %v150 = vadd.f32 0.0, %v149
  %v151 = vpop.f32.mrb[0].mxu0
  %152 = vmatprep.mubr.f32.mxu0 0.0
  %153 = vmatmul.mubr.f32.gmra.mrb[0].mxu0 %v40
  %v154 = vpop.f32.mrb[0].mxu0
  %v155 = vadd.f32 0.0, %v154
  %v156 = vpop.f32.mrb[0].mxu0
  %157 = vmatprep.mubr.f32.mxu0 0.0
  %158 = vmatmul.mubr.f32.gmra.mrb[0].mxu0 %v41
  %v159 = vpop.f32.mrb[0].mxu0
  %v160 = vadd.f32 0.0, %v159
  %v161 = vpop.f32.mrb[0].mxu0
  %162 = vdwg.mxu0
  %v163 = vadd.f32 %v26, %v125
  %v164 = vadd.f32 %v27, %v130
  %v165 = vadd.f32 %v28, %v135
  %v166 = vadd.f32 %v29, %v140
  %v167 = vadd.f32 %v30, %v145
  %v168 = vadd.f32 %v31, %v150
  %v169 = vadd.f32 %v32, %v155
  %v170 = vadd.f32 %v33, %v160
  %v171 = vld [vmem:[%s0] sm:$0xff]
  %v172 = vld [vmem:[%s0 + $0x8] sm:$0xff]
  %v173 = vld [vmem:[%s0 + $0x10] sm:$0xff]
  %v174 = vld [vmem:[%s0 + $0x18] sm:$0xff]
  %v175 = vld [vmem:[%s0 + $0x20] sm:$0xff]
  %v176 = vld [vmem:[%s0 + $0x28] sm:$0xff]
  %v177 = vld [vmem:[%s0 + $0x30] sm:$0xff]
  %v178 = vld [vmem:[%s0 + $0x38] sm:$0xff]
  %v179 = vld [vmem:[%s4] sm:$0xff]
  %v180 = vld [vmem:[%s4 + $0x8] sm:$0xff]
  %v181 = vld [vmem:[%s4 + $0x10] sm:$0xff]
  %v182 = vld [vmem:[%s4 + $0x18] sm:$0xff]
  %v183 = vld [vmem:[%s4 + $0x20] sm:$0xff]
  %v184 = vld [vmem:[%s4 + $0x28] sm:$0xff]
  %v185 = vld [vmem:[%s4 + $0x30] sm:$0xff]
  %v186 = vld [vmem:[%s4 + $0x38] sm:$0xff]
  %v187 = vld [vmem:[%s4 + $0x40] sm:$0xff]
  %v188 = vld [vmem:[%s4 + $0x48] sm:$0xff]
  %v189 = vld [vmem:[%s4 + $0x50] sm:$0xff]
  %v190 = vld [vmem:[%s4 + $0x58] sm:$0xff]
  %v191 = vld [vmem:[%s4 + $0x60] sm:$0xff]
  %v192 = vld [vmem:[%s4 + $0x68] sm:$0xff]
  %v193 = vld [vmem:[%s4 + $0x70] sm:$0xff]
  %v194 = vld [vmem:[%s4 + $0x78] sm:$0xff]
  %v195 = vld [vmem:[%s5] sm:$0xff]
  %v196 = vld [vmem:[%s5 + $0x8] sm:$0xff]
  %v197 = vld [vmem:[%s5 + $0x10] sm:$0xff]
  %v198 = vld [vmem:[%s5 + $0x18] sm:$0xff]
  %v199 = vld [vmem:[%s5 + $0x20] sm:$0xff]
  %v200 = vld [vmem:[%s5 + $0x28] sm:$0xff]
  %v201 = vld [vmem:[%s5 + $0x30] sm:$0xff]
  %v202 = vld [vmem:[%s5 + $0x38] sm:$0xff]
  %v203 = vld [vmem:[%s5 + $0x40] sm:$0xff]
  %v204 = vld [vmem:[%s5 + $0x48] sm:$0xff]
  %v205 = vld [vmem:[%s5 + $0x50] sm:$0xff]
  %v206 = vld [vmem:[%s5 + $0x58] sm:$0xff]
  %v207 = vld [vmem:[%s5 + $0x60] sm:$0xff]
  %v208 = vld [vmem:[%s5 + $0x68] sm:$0xff]
  %v209 = vld [vmem:[%s5 + $0x70] sm:$0xff]
  %v210 = vld [vmem:[%s5 + $0x78] sm:$0xff]
  %211 = vmatprep.subr.mxu0 0.0
  %212 = vmatpush1.msra.mxu0 %v195
  %213 = vmatprep.subr.mxu0 0.0
  %214 = vmatpush1.msra.mxu0 %v196
  %215 = vmatprep.subr.mxu0 0.0
  %216 = vmatpush1.msra.mxu0 %v197
  %217 = vmatprep.subr.mxu0 0.0
  %218 = vmatpush1.msra.mxu0 %v198
  %219 = vmatprep.subr.mxu0 0.0
  %220 = vmatpush1.msra.mxu0 %v199
  %221 = vmatprep.subr.mxu0 0.0
  %222 = vmatpush1.msra.mxu0 %v200
  %223 = vmatprep.subr.mxu0 0.0
  %224 = vmatpush1.msra.mxu0 %v201
  %225 = vmatprep.subr.mxu0 0.0
  %226 = vmatpush1.msra.mxu0 %v202
  %227 = vmatprep.subr.mxu0 0.0
  %228 = vmatpush1.msra.mxu0 %v203
  %229 = vmatprep.subr.mxu0 0.0
  %230 = vmatpush1.msra.mxu0 %v204
  %231 = vmatprep.subr.mxu0 0.0
  %232 = vmatpush1.msra.mxu0 %v205
  %233 = vmatprep.subr.mxu0 0.0
  %234 = vmatpush1.msra.mxu0 %v206
  %235 = vmatprep.subr.mxu0 0.0
  %236 = vmatpush1.msra.mxu0 %v207
  %237 = vmatprep.subr.mxu0 0.0
  %238 = vmatpush1.msra.mxu0 %v208
  %239 = vmatprep.subr.mxu0 0.0
  %240 = vmatpush1.msra.mxu0 %v209
  %241 = vmatprep.subr.mxu0 0.0
  %242 = vmatpush1.msra.mxu0 %v210
  %243 = vmatprep.subr.mxu0 0.0
  %244 = vmatpush1.msra.mxu0 0.0
  %245 = vmatprep.subr.mxu0 0.0
  %246 = vmatpush1.msra.mxu0 0.0
  %247 = vmatprep.subr.mxu0 0.0
  %248 = vmatpush1.msra.mxu0 0.0
  %249 = vmatprep.subr.mxu0 0.0
  %250 = vmatpush1.msra.mxu0 0.0
  %251 = vmatprep.subr.mxu0 0.0
  %252 = vmatpush1.msra.mxu0 0.0
  %253 = vmatprep.subr.mxu0 0.0
  %254 = vmatpush1.msra.mxu0 0.0
  %255 = vmatprep.subr.mxu0 0.0
  %256 = vmatpush1.msra.mxu0 0.0
  %257 = vmatprep.subr.mxu0 0.0
  %258 = vmatpush1.msra.mxu0 0.0
  %259 = vmatprep.subr.mxu0 0.0
  %260 = vmatpush1.msra.mxu0 0.0
  %261 = vmatprep.subr.mxu0 0.0
  %262 = vmatpush1.msra.mxu0 0.0
  %263 = vmatprep.subr.mxu0 0.0
  %264 = vmatpush1.msra.mxu0 0.0
  %265 = vmatprep.subr.mxu0 0.0
  %266 = vmatpush1.msra.mxu0 0.0
  %267 = vmatprep.subr.mxu0 0.0
  %268 = vmatpush1.msra.mxu0 0.0
  %269 = vmatprep.subr.mxu0 0.0
  %270 = vmatpush1.msra.mxu0 0.0
  %271 = vmatprep.subr.mxu0 0.0
  %272 = vmatpush1.msra.mxu0 0.0
  %273 = vmatprep.subr.mxu0 0.0
  %274 = vmatpush1.msra.mxu0 0.0
  %275 = vmatprep.mubr.f32.mxu0 0.0
  %276 = vmatmul.mubr.f32.gmra.mrb[0].mxu0 %v163
  %v277 = vpop.f32.mrb[0].mxu0
  %v278 = vadd.f32 0.0, %v277
  %v279 = vpop.f32.mrb[0].mxu0
  %280 = vmatprep.mubr.f32.mxu0 0.0
  %281 = vmatmul.mubr.f32.gmra.mrb[0].mxu0 %v164
  %v282 = vpop.f32.mrb[0].mxu0
  %v283 = vadd.f32 0.0, %v282
  %v284 = vpop.f32.mrb[0].mxu0
  %285 = vmatprep.mubr.f32.mxu0 0.0
  %286 = vmatmul.mubr.f32.gmra.mrb[0].mxu0 %v165
  %v287 = vpop.f32.mrb[0].mxu0
  %v288 = vadd.f32 0.0, %v287
  %v289 = vpop.f32.mrb[0].mxu0
  %290 = vmatprep.mubr.f32.mxu0 0.0
  %291 = vmatmul.mubr.f32.gmra.mrb[0].mxu0 %v166
  %v292 = vpop.f32.mrb[0].mxu0
  %v293 = vadd.f32 0.0, %v292
  %v294 = vpop.f32.mrb[0].mxu0
  %295 = vmatprep.mubr.f32.mxu0 0.0
  %296 = vmatmul.mubr.f32.gmra.mrb[0].mxu0 %v167
  %v297 = vpop.f32.mrb[0].mxu0
  %v298 = vadd.f32 0.0, %v297
  %v299 = vpop.f32.mrb[0].mxu0
  %300 = vmatprep.mubr.f32.mxu0 0.0
  %301 = vmatmul.mubr.f32.gmra.mrb[0].mxu0 %v168
  %v302 = vpop.f32.mrb[0].mxu0
  %v303 = vadd.f32 0.0, %v302
  %v304 = vpop.f32.mrb[0].mxu0
  %305 = vmatprep.mubr.f32.mxu0 0.0
  %306 = vmatmul.mubr.f32.gmra.mrb[0].mxu0 %v169
  %v307 = vpop.f32.mrb[0].mxu0
  %v308 = vadd.f32 0.0, %v307
  %v309 = vpop.f32.mrb[0].mxu0
  %310 = vmatprep.mubr.f32.mxu0 0.0
  %311 = vmatmul.mubr.f32.gmra.mrb[0].mxu0 %v170
  %v312 = vpop.f32.mrb[0].mxu0
  %v313 = vadd.f32 0.0, %v312
  %v314 = vpop.f32.mrb[0].mxu0
  %315 = vdwg.mxu0
  %316 = vmatprep.subr.mxu0 0.0
  %317 = vmatpush1.msra.mxu0 %v179
  %318 = vmatprep.subr.mxu0 0.0
  %319 = vmatpush1.msra.mxu0 %v180
  %320 = vmatprep.subr.mxu0 0.0
  %321 = vmatpush1.msra.mxu0 %v181
  %322 = vmatprep.subr.mxu0 0.0
  %323 = vmatpush1.msra.mxu0 %v182
  %324 = vmatprep.subr.mxu0 0.0
  %325 = vmatpush1.msra.mxu0 %v183
  %326 = vmatprep.subr.mxu0 0.0
  %327 = vmatpush1.msra.mxu0 %v184
  %328 = vmatprep.subr.mxu0 0.0
  %329 = vmatpush1.msra.mxu0 %v185
  %330 = vmatprep.subr.mxu0 0.0
  %331 = vmatpush1.msra.mxu0 %v186
  %332 = vmatprep.subr.mxu0 0.0
  %333 = vmatpush1.msra.mxu0 %v187
  %334 = vmatprep.subr.mxu0 0.0
  %335 = vmatpush1.msra.mxu0 %v188
  %336 = vmatprep.subr.mxu0 0.0
  %337 = vmatpush1.msra.mxu0 %v189
  %338 = vmatprep.subr.mxu0 0.0
  %339 = vmatpush1.msra.mxu0 %v190
  %340 = vmatprep.subr.mxu0 0.0
  %341 = vmatpush1.msra.mxu0 %v191
  %342 = vmatprep.subr.mxu0 0.0
  %343 = vmatpush1.msra.mxu0 %v192
  %344 = vmatprep.subr.mxu0 0.0
  %345 = vmatpush1.msra.mxu0 %v193
  %346 = vmatprep.subr.mxu0 0.0
  %347 = vmatpush1.msra.mxu0 %v194
  %348 = vmatprep.subr.mxu0 0.0
  %349 = vmatpush1.msra.mxu0 0.0
  %350 = vmatprep.subr.mxu0 0.0
  %351 = vmatpush1.msra.mxu0 0.0
  %352 = vmatprep.subr.mxu0 0.0
  %353 = vmatpush1.msra.mxu0 0.0
  %354 = vmatprep.subr.mxu0 0.0
  %355 = vmatpush1.msra.mxu0 0.0
  %356 = vmatprep.subr.mxu0 0.0
  %357 = vmatpush1.msra.mxu0 0.0
  %358 = vmatprep.subr.mxu0 0.0
  %359 = vmatpush1.msra.mxu0 0.0
  %360 = vmatprep.subr.mxu0 0.0
  %361 = vmatpush1.msra.mxu0 0.0
  %362 = vmatprep.subr.mxu0 0.0
  %363 = vmatpush1.msra.mxu0 0.0
  %364 = vmatprep.subr.mxu0 0.0
  %365 = vmatpush1.msra.mxu0 0.0
  %366 = vmatprep.subr.mxu0 0.0
  %367 = vmatpush1.msra.mxu0 0.0
  %368 = vmatprep.subr.mxu0 0.0
  %369 = vmatpush1.msra.mxu0 0.0
  %370 = vmatprep.subr.mxu0 0.0
  %371 = vmatpush1.msra.mxu0 0.0
  %372 = vmatprep.subr.mxu0 0.0
  %373 = vmatpush1.msra.mxu0 0.0
  %374 = vmatprep.subr.mxu0 0.0
  %375 = vmatpush1.msra.mxu0 0.0
  %376 = vmatprep.subr.mxu0 0.0
  %377 = vmatpush1.msra.mxu0 0.0
  %378 = vmatprep.subr.mxu0 0.0
  %379 = vmatpush1.msra.mxu0 0.0
  %380 = vmatprep.mubr.f32.mxu0 0.0
  %381 = vmatmul.mubr.f32.gmra.mrb[0].mxu0 %v171
  %v382 = vpop.f32.mrb[0].mxu0
  %v383 = vadd.f32 %v278, %v382
  %v384 = vpop.f32.mrb[0].mxu0
  %385 = vmatprep.mubr.f32.mxu0 0.0
  %386 = vmatmul.mubr.f32.gmra.mrb[0].mxu0 %v172
  %v387 = vpop.f32.mrb[0].mxu0
  %v388 = vadd.f32 %v283, %v387
  %v389 = vpop.f32.mrb[0].mxu0
  %390 = vmatprep.mubr.f32.mxu0 0.0
  %391 = vmatmul.mubr.f32.gmra.mrb[0].mxu0 %v173
  %v392 = vpop.f32.mrb[0].mxu0
  %v393 = vadd.f32 %v288, %v392
  %v394 = vpop.f32.mrb[0].mxu0
  %395 = vmatprep.mubr.f32.mxu0 0.0
  %396 = vmatmul.mubr.f32.gmra.mrb[0].mxu0 %v174
  %v397 = vpop.f32.mrb[0].mxu0
  %v398 = vadd.f32 %v293, %v397
  %v399 = vpop.f32.mrb[0].mxu0
  %400 = vmatprep.mubr.f32.mxu0 0.0
  %401 = vmatmul.mubr.f32.gmra.mrb[0].mxu0 %v175
  %v402 = vpop.f32.mrb[0].mxu0
  %v403 = vadd.f32 %v298, %v402
  %v404 = vpop.f32.mrb[0].mxu0
  %405 = vmatprep.mubr.f32.mxu0 0.0
  %406 = vmatmul.mubr.f32.gmra.mrb[0].mxu0 %v176
  %v407 = vpop.f32.mrb[0].mxu0
  %v408 = vadd.f32 %v303, %v407
  %v409 = vpop.f32.mrb[0].mxu0
  %410 = vmatprep.mubr.f32.mxu0 0.0
  %411 = vmatmul.mubr.f32.gmra.mrb[0].mxu0 %v177
  %v412 = vpop.f32.mrb[0].mxu0
  %v413 = vadd.f32 %v308, %v412
  %v414 = vpop.f32.mrb[0].mxu0
  %415 = vmatprep.mubr.f32.mxu0 0.0
  %416 = vmatmul.mubr.f32.gmra.mrb[0].mxu0 %v178
  %v417 = vpop.f32.mrb[0].mxu0
  %v418 = vadd.f32 %v313, %v417
  %v419 = vpop.f32.mrb[0].mxu0
  %420 = vdwg.mxu0
  %v421 = vld [vmem:[%s6] sm:$0x1]
  %v423 = vlaneseq
  %v424 = vshrl.u32 %v423, 7
  %v425 = vsub.s32 0, %v424
  %v426 = vrot.slane %v421, %v425
  %v428 = vadd.f32 %v383, %v426
  %v429 = vadd.f32 %v388, %v426
  %v430 = vadd.f32 %v393, %v426
  %v431 = vadd.f32 %v398, %v426
  %v432 = vadd.f32 %v403, %v426
  %v433 = vadd.f32 %v408, %v426
  %v434 = vadd.f32 %v413, %v426
  %v435 = vadd.f32 %v418, %v426
  %436 = vmax.xlane.f32.xlu0 %v428
  %v437 = vpop.xlane.xlu0 %436
  %438 = vmax.xlane.f32.xlu0 %v429
  %v439 = vpop.xlane.xlu0 %438
  %440 = vmax.xlane.f32.xlu0 %v430
  %v441 = vpop.xlane.xlu0 %440
  %442 = vmax.xlane.f32.xlu0 %v431
  %v443 = vpop.xlane.xlu0 %442
  %444 = vmax.xlane.f32.xlu0 %v432
  %v445 = vpop.xlane.xlu0 %444
  %446 = vmax.xlane.f32.xlu0 %v433
  %v447 = vpop.xlane.xlu0 %446
  %448 = vmax.xlane.f32.xlu0 %v434
  %v449 = vpop.xlane.xlu0 %448
  %450 = vmax.xlane.f32.xlu0 %v435
  %v451 = vpop.xlane.xlu0 %450
  %v452 = vsub.f32 %v428, %v437
  %v453 = vsub.f32 %v429, %v439
  %v454 = vsub.f32 %v430, %v441
  %v455 = vsub.f32 %v431, %v443
  %v456 = vsub.f32 %v432, %v445
  %v457 = vsub.f32 %v433, %v447
  %v458 = vsub.f32 %v434, %v449
  %v459 = vsub.f32 %v435, %v451
  %v460 = vmul.f32 %v452, 1.442695
  %v461 = vpow.pop %v460
  %v462 = vmul.f32 %v453, 1.442695
  %v463 = vpow.pop %v462
  %v464 = vmul.f32 %v454, 1.442695
  %v465 = vpow.pop %v464
  %v466 = vmul.f32 %v455, 1.442695
  %v467 = vpow.pop %v466
  %v468 = vmul.f32 %v456, 1.442695
  %v469 = vpow.pop %v468
  %v470 = vmul.f32 %v457, 1.442695
  %v471 = vpow.pop %v470
  %v472 = vmul.f32 %v458, 1.442695
  %v473 = vpow.pop %v472
  %v474 = vmul.f32 %v459, 1.442695
  %v475 = vpow.pop %v474
  %476 = vadd.xlane.f32.xlu0 %v461
  %v477 = vpop.xlane.xlu0 %476
  %478 = vadd.xlane.f32.xlu0 %v463
  %v479 = vpop.xlane.xlu0 %478
  %480 = vadd.xlane.f32.xlu0 %v465
  %v481 = vpop.xlane.xlu0 %480
  %482 = vadd.xlane.f32.xlu0 %v467
  %v483 = vpop.xlane.xlu0 %482
  %484 = vadd.xlane.f32.xlu0 %v469
  %v485 = vpop.xlane.xlu0 %484
  %486 = vadd.xlane.f32.xlu0 %v471
  %v487 = vpop.xlane.xlu0 %486
  %488 = vadd.xlane.f32.xlu0 %v473
  %v489 = vpop.xlane.xlu0 %488
  %490 = vadd.xlane.f32.xlu0 %v475
  %v491 = vpop.xlane.xlu0 %490
  %v492 = vlog2.pop %v477
  %v493 = vmul.f32 %v492, 0.6931472
  %v494 = vlog2.pop %v479
  %v495 = vmul.f32 %v494, 0.6931472
  %v496 = vlog2.pop %v481
  %v497 = vmul.f32 %v496, 0.6931472
  %v498 = vlog2.pop %v483
  %v499 = vmul.f32 %v498, 0.6931472
  %v500 = vlog2.pop %v485
  %v501 = vmul.f32 %v500, 0.6931472
  %v502 = vlog2.pop %v487
  %v503 = vmul.f32 %v502, 0.6931472
  %v504 = vlog2.pop %v489
  %v505 = vmul.f32 %v504, 0.6931472
  %v506 = vlog2.pop %v491
  %v507 = vmul.f32 %v506, 0.6931472
  %v508 = vsub.f32 %v452, %v493
  %v509 = vsub.f32 %v453, %v495
  %v510 = vsub.f32 %v454, %v497
  %v511 = vsub.f32 %v455, %v499
  %v512 = vsub.f32 %v456, %v501
  %v513 = vsub.f32 %v457, %v503
  %v514 = vsub.f32 %v458, %v505
  %v515 = vsub.f32 %v459, %v507
  %516 = vst [vmem:[%s7] sm:$0xff] %v508
  %517 = vst [vmem:[%s7 + $0x8] sm:$0xff] %v509
  %518 = vst [vmem:[%s7 + $0x10] sm:$0xff] %v510
  %519 = vst [vmem:[%s7 + $0x18] sm:$0xff] %v511
  %520 = vst [vmem:[%s7 + $0x20] sm:$0xff] %v512
  %521 = vst [vmem:[%s7 + $0x28] sm:$0xff] %v513
  %522 = vst [vmem:[%s7 + $0x30] sm:$0xff] %v514
  %523 = vst [vmem:[%s7 + $0x38] sm:$0xff] %v515
  // Predicated region
  $region30: #{rnn_sequence.3} parent=0 // pred_check
    _
  $region31: #{rnn_sequence.3} parent=0 // pred_check_branch
    %525 = sbr.rel (0) target = $region33
  $region32: #{rnn_sequence.3} parent=0 // pred_region
    _
  $region33: #{rnn_sequence.3} parent=0 // pred_fallthru
    _
  // Predicated region
  $region34: #{rnn_sequence.3} parent=0 // pred_check
    _
  $region35: #{rnn_sequence.3} parent=0 // pred_check_branch
    %527 = sbr.rel (0) target = $region37
  $region36: #{rnn_sequence.3} parent=0 // pred_region
    _
  $region37: #{rnn_sequence.3} parent=0 // pred_fallthru
    _

</llo_original>
